<compile_context>
chip_gen: v6e
topology: v6e:2x2x1
jax: 0.10.0
libtpu: 0.0.40
codegen_flags: <defaults>
</compile_context>

<pallas_src>
import functools

import jax
import jax.numpy as jnp
from jax import lax
from jax.experimental import pallas as pl
from jax.experimental.pallas import tpu as pltpu


_SQRT_HALF = 0.7071067811865476
_LN_EPS = 1e-5

# Row layout of the packed (8, H_pad) parameter-vector block.
_ROW_POOLER_B, _ROW_GAMMA, _ROW_BETA, _ROW_B1, _ROW_B2 = 0, 1, 2, 3, 4


def _round_up(x, m):
    return ((x + m - 1) // m) * m


def _cdiv(a, b):
    return -(-a // b)


def _gelu_exact(x):
    # PyTorch F.gelu default == exact erf-based GELU (f32 math here).
    return 0.5 * x * (1.0 + lax.erf(x * _SQRT_HALF))


def _head_kernel(cls_ref, pw_ref, vecs_ref, w1_ref, w2_ref, wc_ref, bc_ref,
                 out_ref, *, inv_h):
    """Fused pooler + classification head for one (tm, H_pad) batch tile."""
    mm_dtype = w1_ref.dtype  # matmul operand dtype (bf16)

    pooler_b = vecs_ref[_ROW_POOLER_B:_ROW_POOLER_B + 1, :]
    gamma = vecs_ref[_ROW_GAMMA:_ROW_GAMMA + 1, :]
    beta = vecs_ref[_ROW_BETA:_ROW_BETA + 1, :]
    b1 = vecs_ref[_ROW_B1:_ROW_B1 + 1, :]
    b2 = vecs_ref[_ROW_B2:_ROW_B2 + 1, :]

    # Stand-in pooler (fused): pooled = tanh(cls @ Wp + bp); tanh -> EUP slot.
    pooled = jnp.tanh(
        jnp.dot(cls_ref[...], pw_ref[...], preferred_element_type=jnp.float32)
        + pooler_b)

    # dropout1: identity in eval mode.
    # One-pass LayerNorm (sum & sum-of-squares in a single sweep).  Divisor is
    # the REAL hidden size so the zero-padded lanes (H -> H_pad) don't bias
    # the statistics; numerically safe because pooled = tanh(.) in [-1, 1].
    x = pooled
    s1 = jnp.sum(x, axis=-1, keepdims=True)
    s2 = jnp.sum(x * x, axis=-1, keepdims=True)
    mean = s1 * inv_h
    var = s2 * inv_h - mean * mean
    x = (x - mean) * lax.rsqrt(var + _LN_EPS)
    x = x * gamma + beta  # gamma/beta are zero in padded lanes -> pads stay 0.

    # Residual block 1: gelu(intermediate1(x)); dropout2 identity; + residual.
    residual = x
    h = jnp.dot(x.astype(mm_dtype), w1_ref[...],
                preferred_element_type=jnp.float32) + b1
    x = _gelu_exact(h) + residual

    # Residual block 2.
    residual = x
    h = jnp.dot(x.astype(mm_dtype), w2_ref[...],
                preferred_element_type=jnp.float32) + b2
    x = _gelu_exact(h) + residual

    # Classifier: lane-dense, 128-wide padded output -> unmasked f32 stores.
    out_ref[...] = (jnp.dot(x.astype(mm_dtype), wc_ref[...],
                            preferred_element_type=jnp.float32)
                    + bc_ref[...]).astype(out_ref.dtype)


@functools.partial(
    jax.jit,
    static_argnames=("real_h", "max_rows_per_tile", "single_buffer_params"))
def _head_call(cls_hidden, pooler_w, vecs, w1, w2, wc, bc, *,
               real_h, max_rows_per_tile, single_buffer_params):
    """cls_hidden: (B, H_pad) in matmul dtype.  Weights kernel-ready (in, out)
    and lane/contraction padded; `vecs` is the packed (8, H_pad) f32 block."""
    B, H = cls_hidden.shape
    C_pad = wc.shape[1]

    # Batch tile: multiple of 8, <= max_rows_per_tile, and split into >=2
    # tiles when possible so both v7x TensorCores get work on the parallel axis.
    tm = max(8, min(max_rows_per_tile, _round_up(_cdiv(B, 2), 8)))
    b_pad = _round_up(B, tm)
    if b_pad != B:
        cls_hidden = jnp.pad(cls_hidden, ((0, b_pad - B), (0, 0)))
    grid = (b_pad // tm,)

    if single_buffer_params:
        # Constant index_map -> never re-fetched -> one VMEM buffer suffices.
        fixed_spec = lambda shape: pl.BlockSpec(
            shape, lambda i: (0, 0), pipeline_mode=pl.Buffered(1))
    else:
        fixed_spec = lambda shape: pl.BlockSpec(shape, lambda i: (0, 0))
    row_spec = lambda shape: pl.BlockSpec(shape, lambda i: (i, 0))

    # Scoped-VMEM budget from the actual buffers (params x nbuf, double-
    # buffered I/O tiles, generous f32 intermediates), clamped to
    # [16 MiB, 64 MiB] so we never exceed v7x physical VMEM and never shrink
    # below the smallest platform default.
    wbytes = jnp.dtype(w1.dtype).itemsize
    cbytes = jnp.dtype(cls_hidden.dtype).itemsize
    nbuf = 1 if single_buffer_params else 2
    param_bytes = nbuf * (3 * H * H * wbytes + 8 * H * 4
                          + H * C_pad * wbytes + 8 * C_pad * 4)
    io_bytes = 2 * tm * H * cbytes + 2 * tm * C_pad * 4
    act_bytes = 8 * tm * H * 4
    vmem_limit = int(min(max(param_bytes + io_bytes + act_bytes + (4 << 20),
                             16 << 20), 64 << 20))

    kernel = functools.partial(_head_kernel, inv_h=1.0 / float(real_h))

    out = pl.pallas_call(
        kernel,
        out_shape=jax.ShapeDtypeStruct((b_pad, C_pad), jnp.float32),
        grid=grid,
        in_specs=[
            row_spec((tm, H)),        # cls_hidden tile (pipelined over batch)
            fixed_spec((H, H)),       # pooler weight (resident)
            fixed_spec((8, H)),       # packed pooler_b/gamma/beta/b1/b2
            fixed_spec((H, H)),       # intermediate1 weight
            fixed_spec((H, H)),       # intermediate2 weight
            fixed_spec((H, C_pad)),   # classifier weight (lane-padded)
            fixed_spec((1, C_pad)),   # classifier bias   (lane-padded)
        ],
        out_specs=row_spec((tm, C_pad)),
        compiler_params=pltpu.CompilerParams(
            dimension_semantics=("parallel",),
            vmem_limit_bytes=vmem_limit),
    )(cls_hidden, pooler_w, vecs, w1, w2, wc, bc)
    return out[:B]


_SINGLE_BUFFER_PARAMS_OK = None  # cached capability probe for pl.Buffered(1)


def codebert_head_pallas(cls_hidden, pooler_w, vecs, w1, w2, wc, bc, *,
                         real_h, max_rows_per_tile=256):
    """Prefer single-buffered resident params; fall back (once, cached) if the
    installed Pallas rejects pipeline_mode=pl.Buffered(1) on the outer grid."""
    global _SINGLE_BUFFER_PARAMS_OK
    args = (cls_hidden, pooler_w, vecs, w1, w2, wc, bc)
    if _SINGLE_BUFFER_PARAMS_OK is None:
        try:
            out = _head_call(*args, real_h=real_h,
                             max_rows_per_tile=max_rows_per_tile,
                             single_buffer_params=True)
            jax.block_until_ready(out)
            _SINGLE_BUFFER_PARAMS_OK = True
            return out
        except Exception:
            _SINGLE_BUFFER_PARAMS_OK = False
    return _head_call(*args, real_h=real_h,
                      max_rows_per_tile=max_rows_per_tile,
                      single_buffer_params=_SINGLE_BUFFER_PARAMS_OK)


class CodeBERTWrapperPallas:
    """Deterministic synthetic re-implementation of CodeBERTWrapper.forward
    (eval mode: dropout == identity)."""

    def __init__(self, n_classes, hidden_size=32, vocab_size=64, key=None,
                 weight_dtype=jnp.bfloat16):
        # TODO(synk): the pretrained CodeBERT transformer backbone
        # (AutoModel.from_pretrained) has no Pallas equivalent here; a tiny
        # deterministic embedding + tanh(Linear) pooler stand-in produces the
        # same (B, hidden) `pooled` contract.  The pooler matmul itself is
        # fused into the Pallas kernel.
        if key is None:
            key = jax.random.PRNGKey(0)
        ks = jax.random.split(key, 8)
        H, C = hidden_size, n_classes
        H_pad = _round_up(H, 128)  # full-lane / MXU-friendly contractions
        C_pad = _round_up(C, 128)  # lane-dense classifier output
        scale = 0.02
        f32 = jnp.float32

        self.hidden_size = H
        self.h_pad = H_pad
        self.n_classes = C
        self.c_pad = C_pad
        self.weight_dtype = weight_dtype

        # Synthetic backbone embedding (gather stays in plain JAX glue),
        # zero-padded to H_pad exactly once.
        embed = scale * jax.random.normal(ks[0], (vocab_size, H), f32)
        self.embed = jnp.zeros((vocab_size, H_pad), f32).at[:, :H].set(embed)

        def mm_weight(k, out_dim, in_dim, out_pad, in_pad):
            # PyTorch-style (out, in), transposed ONCE to kernel-ready
            # (in, out), zero-padded, stored in the matmul dtype.
            w_pt = scale * jax.random.normal(k, (out_dim, in_dim), f32)
            w = jnp.zeros((in_pad, out_pad), f32).at[:in_dim, :out_dim].set(w_pt.T)
            return jnp.asarray(w, weight_dtype)

        self.pooler_w = mm_weight(ks[1], H, H, H_pad, H_pad)
        self.w1 = mm_weight(ks[2], H, H, H_pad, H_pad)
        self.w2 = mm_weight(ks[4], H, H, H_pad, H_pad)
        self.wc = mm_weight(ks[6], C, H, C_pad, H_pad)

        # Pack the five (1, H) parameter vectors into one (8, H_pad) f32 block
        # -> one resident DMA / one VMEM allocation instead of five.
        b1 = scale * jax.random.normal(ks[3], (H,), f32)
        b2 = scale * jax.random.normal(ks[5], (H,), f32)
        vecs = jnp.zeros((8, H_pad), f32)
        vecs = vecs.at[_ROW_GAMMA, :H].set(1.0)   # LayerNorm gamma
        vecs = vecs.at[_ROW_B1, :H].set(b1)
        vecs = vecs.at[_ROW_B2, :H].set(b2)
        # pooler bias and LayerNorm beta rows stay zero (and so do pad lanes).
        self.vecs = vecs

        bc = scale * jax.random.normal(ks[7], (C,), f32)
        self.bc = jnp.zeros((1, C_pad), f32).at[0, :C].set(bc)

    def backbone_cls_hidden(self, input_ids, attention_mask):
        # attention_mask would only matter inside the (untranslated) attention
        # layers; the CLS pooler does not use it.
        del attention_mask
        return jnp.take(self.embed, input_ids[:, 0], axis=0).astype(self.weight_dtype)

    def __call__(self, input_ids, attention_mask):
        cls_hidden = self.backbone_cls_hidden(input_ids, attention_mask)  # (B, H_pad)
        logits_pad = codebert_head_pallas(
            cls_hidden, self.pooler_w, self.vecs, self.w1, self.w2,
            self.wc, self.bc, real_h=self.hidden_size)
        return logits_pad[:, :self.n_classes]


def _reference_forward(model, input_ids, attention_mask):
    """Pure-JAX reference on the UNPADDED slices with conventional two-pass
    LayerNorm (checks both the padding scheme and the one-pass LN)."""
    H, C = model.hidden_size, model.n_classes
    mmdt = model.weight_dtype
    cls = model.backbone_cls_hidden(input_ids, attention_mask)[:, :H]
    pooled = jnp.tanh(
        jnp.dot(cls, model.pooler_w[:H, :H], preferred_element_type=jnp.float32)
        + model.vecs[_ROW_POOLER_B, :H])
    gamma = model.vecs[_ROW_GAMMA, :H]
    beta = model.vecs[_ROW_BETA, :H]
    x = pooled
    mean = jnp.mean(x, axis=-1, keepdims=True)
    var = jnp.mean((x - mean) ** 2, axis=-1, keepdims=True)
    x = (x - mean) / jnp.sqrt(var + _LN_EPS) * gamma + beta
    r = x
    x = jax.nn.gelu(jnp.dot(x.astype(mmdt), model.w1[:H, :H],
                            preferred_element_type=jnp.float32)
                    + model.vecs[_ROW_B1, :H], approximate=False) + r
    r = x
    x = jax.nn.gelu(jnp.dot(x.astype(mmdt), model.w2[:H, :H],
                            preferred_element_type=jnp.float32)
                    + model.vecs[_ROW_B2, :H], approximate=False) + r
    logits = jnp.dot(x.astype(mmdt), model.wc[:H, :C],
                     preferred_element_type=jnp.float32) + model.bc[0, :C]
    return logits


if __name__ == "__main__":
    key = jax.random.PRNGKey(0)
    k_ids, k_params, k_ids2 = jax.random.split(key, 3)

    batch, seq, hidden, n_classes, vocab = 2, 8, 32, 4, 64
    input_ids = jax.random.randint(k_ids, (batch, seq), 0, vocab, dtype=jnp.int32)
    attention_mask = jnp.ones((batch, seq), jnp.int32)

    model = CodeBERTWrapperPallas(n_classes, hidden_size=hidden,
                                  vocab_size=vocab, key=k_params)

    logits = model(input_ids, attention_mask)
    jax.block_until_ready(logits)
    assert logits.shape == (batch, n_classes)

    ref = _reference_forward(model, input_ids, attention_mask)
    assert jnp.allclose(logits, ref, atol=2e-3, rtol=2e-2), (
        float(jnp.max(jnp.abs(logits - ref))))

    # Also exercise the multi-tile batch grid path (grid > 1, rows pipelined).
    big_b = 32
    big_ids = jax.random.randint(k_ids2, (big_b, seq), 0, vocab, dtype=jnp.int32)
    big_mask = jnp.ones((big_b, seq), jnp.int32)
    cls_big = model.backbone_cls_hidden(big_ids, big_mask)
    logits_big = codebert_head_pallas(
        cls_big, model.pooler_w, model.vecs, model.w1, model.w2,
        model.wc, model.bc, real_h=hidden, max_rows_per_tile=8)[:, :n_classes]
    jax.block_until_ready(logits_big)
    ref_big = _reference_forward(model, big_ids, big_mask)
    assert logits_big.shape == (big_b, n_classes)
    assert jnp.allclose(logits_big, ref_big, atol=2e-3, rtol=2e-2), (
        float(jnp.max(jnp.abs(logits_big - ref_big))))

    print("KERNEL_OK")
</pallas_src>

<mosaic_0001>
module attributes {stable_mosaic.version = 11 : i64} {
  func.func @_head_kernel(%arg0: i32, %arg1: memref<8x128xbf16, #tpu.memory_space<vmem>>, %arg2: memref<128x128xbf16, #tpu.memory_space<vmem>>, %arg3: memref<8x128xf32, #tpu.memory_space<vmem>>, %arg4: memref<128x128xbf16, #tpu.memory_space<vmem>>, %arg5: memref<128x128xbf16, #tpu.memory_space<vmem>>, %arg6: memref<128x128xbf16, #tpu.memory_space<vmem>>, %arg7: memref<1x128xf32, #tpu.memory_space<vmem>>, %arg8: memref<8x128xf32, #tpu.memory_space<vmem>>) attributes {dimension_semantics = [#tpu.dimension_semantics<parallel>], iteration_bounds = array<i64: 1>, scalar_prefetch = 0 : i64, scratch_operands = 0 : i64, tpu.core_type = #tpu.core_type<tc>, window_params = [{transform_indices = @transform_0, window_bounds = array<i64: 8, 128>}, {pipeline_mode = #tpu.pipeline_mode<synchronous>, transform_indices = @transform_1, window_bounds = array<i64: 128, 128>}, {pipeline_mode = #tpu.pipeline_mode<synchronous>, transform_indices = @transform_2, window_bounds = array<i64: 8, 128>}, {pipeline_mode = #tpu.pipeline_mode<synchronous>, transform_indices = @transform_3, window_bounds = array<i64: 128, 128>}, {pipeline_mode = #tpu.pipeline_mode<synchronous>, transform_indices = @transform_4, window_bounds = array<i64: 128, 128>}, {pipeline_mode = #tpu.pipeline_mode<synchronous>, transform_indices = @transform_5, window_bounds = array<i64: 128, 128>}, {pipeline_mode = #tpu.pipeline_mode<synchronous>, transform_indices = @transform_6, window_bounds = array<i64: 1, 128>}, {transform_indices = @transform_7, window_bounds = array<i64: 8, 128>}]} {
    %c0 = arith.constant 0 : index
    %c0_0 = arith.constant 0 : index
    %0 = vector.load %arg3[%c0, %c0_0] : memref<8x128xf32, #tpu.memory_space<vmem>>, vector<1x128xf32>
    %c1 = arith.constant 1 : index
    %c0_1 = arith.constant 0 : index
    %1 = vector.load %arg3[%c1, %c0_1] : memref<8x128xf32, #tpu.memory_space<vmem>>, vector<1x128xf32>
    %c2 = arith.constant 2 : index
    %c0_2 = arith.constant 0 : index
    %2 = vector.load %arg3[%c2, %c0_2] : memref<8x128xf32, #tpu.memory_space<vmem>>, vector<1x128xf32>
    %c3 = arith.constant 3 : index
    %c0_3 = arith.constant 0 : index
    %3 = vector.load %arg3[%c3, %c0_3] : memref<8x128xf32, #tpu.memory_space<vmem>>, vector<1x128xf32>
    %c4 = arith.constant 4 : index
    %c0_4 = arith.constant 0 : index
    %4 = vector.load %arg3[%c4, %c0_4] : memref<8x128xf32, #tpu.memory_space<vmem>>, vector<1x128xf32>
    %c0_5 = arith.constant 0 : index
    %c0_6 = arith.constant 0 : index
    %5 = vector.load %arg1[%c0_5, %c0_6] : memref<8x128xbf16, #tpu.memory_space<vmem>>, vector<8x128xbf16>
    %c0_7 = arith.constant 0 : index
    %c0_8 = arith.constant 0 : index
    %6 = vector.load %arg2[%c0_7, %c0_8] : memref<128x128xbf16, #tpu.memory_space<vmem>>, vector<128x128xbf16>
    %cst = arith.constant dense<0.000000e+00> : vector<8x128xf32>
    %7 = tpu.matmul %5, %6, %cst {dimension_numbers = #tpu.dot_dimension_numbers<[1], [0], [0], [1], [0, 0, 1, 1], [], []>} : vector<8x128xbf16>, vector<128x128xbf16>, vector<8x128xf32> -> vector<8x128xf32>
    %8 = vector.broadcast %0 : vector<1x128xf32> to vector<8x128xf32>
    %9 = arith.addf %7, %8 : vector<8x128xf32>
    %10 = math.tanh %9 : vector<8x128xf32>
    %cst_9 = arith.constant dense<0.000000e+00> : vector<8xf32>
    %11 = vector.multi_reduction <add>, %10, %cst_9 [1] : vector<8x128xf32> to vector<8xf32>
    %12 = vector.shape_cast %11 : vector<8xf32> to vector<8x1xf32>
    %13 = arith.mulf %10, %10 : vector<8x128xf32>
    %cst_10 = arith.constant dense<0.000000e+00> : vector<8xf32>
    %14 = vector.multi_reduction <add>, %13, %cst_10 [1] : vector<8x128xf32> to vector<8xf32>
    %15 = vector.shape_cast %14 : vector<8xf32> to vector<8x1xf32>
    %cst_11 = arith.constant 3.125000e-02 : f32
    %16 = vector.broadcast %cst_11 : f32 to vector<8x1xf32>
    %17 = arith.mulf %12, %16 : vector<8x1xf32>
    %cst_12 = arith.constant 3.125000e-02 : f32
    %18 = vector.broadcast %cst_12 : f32 to vector<8x1xf32>
    %19 = arith.mulf %15, %18 : vector<8x1xf32>
    %20 = arith.mulf %17, %17 : vector<8x1xf32>
    %21 = arith.subf %19, %20 : vector<8x1xf32>
    %22 = vector.broadcast %17 : vector<8x1xf32> to vector<8x128xf32>
    %23 = arith.subf %10, %22 : vector<8x128xf32>
    %cst_13 = arith.constant 9.99999974E-6 : f32
    %24 = vector.broadcast %cst_13 : f32 to vector<8x1xf32>
    %25 = arith.addf %21, %24 : vector<8x1xf32>
    %26 = math.rsqrt %25 : vector<8x1xf32>
    %27 = vector.broadcast %26 : vector<8x1xf32> to vector<8x128xf32>
    %28 = arith.mulf %23, %27 : vector<8x128xf32>
    %29 = vector.broadcast %1 : vector<1x128xf32> to vector<8x128xf32>
    %30 = arith.mulf %28, %29 : vector<8x128xf32>
    %31 = vector.broadcast %2 : vector<1x128xf32> to vector<8x128xf32>
    %32 = arith.addf %30, %31 : vector<8x128xf32>
    %33 = arith.truncf %32 : vector<8x128xf32> to vector<8x128xbf16>
    %c0_14 = arith.constant 0 : index
    %c0_15 = arith.constant 0 : index
    %34 = vector.load %arg4[%c0_14, %c0_15] : memref<128x128xbf16, #tpu.memory_space<vmem>>, vector<128x128xbf16>
    %cst_16 = arith.constant dense<0.000000e+00> : vector<8x128xf32>
    %35 = tpu.matmul %33, %34, %cst_16 {dimension_numbers = #tpu.dot_dimension_numbers<[1], [0], [0], [1], [0, 0, 1, 1], [], []>} : vector<8x128xbf16>, vector<128x128xbf16>, vector<8x128xf32> -> vector<8x128xf32>
    %36 = vector.broadcast %3 : vector<1x128xf32> to vector<8x128xf32>
    %37 = arith.addf %35, %36 : vector<8x128xf32>
    %cst_17 = arith.constant 5.000000e-01 : f32
    %38 = vector.broadcast %cst_17 : f32 to vector<8x128xf32>
    %39 = arith.mulf %38, %37 : vector<8x128xf32>
    %cst_18 = arith.constant 0.707106769 : f32
    %40 = vector.broadcast %cst_18 : f32 to vector<8x128xf32>
    %41 = arith.mulf %37, %40 : vector<8x128xf32>
    %42 = math.erf %41 : vector<8x128xf32>
    %cst_19 = arith.constant 1.000000e+00 : f32
    %43 = vector.broadcast %cst_19 : f32 to vector<8x128xf32>
    %44 = arith.addf %43, %42 : vector<8x128xf32>
    %45 = arith.mulf %39, %44 : vector<8x128xf32>
    %46 = arith.addf %45, %32 : vector<8x128xf32>
    %47 = arith.truncf %46 : vector<8x128xf32> to vector<8x128xbf16>
    %c0_20 = arith.constant 0 : index
    %c0_21 = arith.constant 0 : index
    %48 = vector.load %arg5[%c0_20, %c0_21] : memref<128x128xbf16, #tpu.memory_space<vmem>>, vector<128x128xbf16>
    %cst_22 = arith.constant dense<0.000000e+00> : vector<8x128xf32>
    %49 = tpu.matmul %47, %48, %cst_22 {dimension_numbers = #tpu.dot_dimension_numbers<[1], [0], [0], [1], [0, 0, 1, 1], [], []>} : vector<8x128xbf16>, vector<128x128xbf16>, vector<8x128xf32> -> vector<8x128xf32>
    %50 = vector.broadcast %4 : vector<1x128xf32> to vector<8x128xf32>
    %51 = arith.addf %49, %50 : vector<8x128xf32>
    %cst_23 = arith.constant 5.000000e-01 : f32
    %52 = vector.broadcast %cst_23 : f32 to vector<8x128xf32>
    %53 = arith.mulf %52, %51 : vector<8x128xf32>
    %cst_24 = arith.constant 0.707106769 : f32
    %54 = vector.broadcast %cst_24 : f32 to vector<8x128xf32>
    %55 = arith.mulf %51, %54 : vector<8x128xf32>
    %56 = math.erf %55 : vector<8x128xf32>
    %cst_25 = arith.constant 1.000000e+00 : f32
    %57 = vector.broadcast %cst_25 : f32 to vector<8x128xf32>
    %58 = arith.addf %57, %56 : vector<8x128xf32>
    %59 = arith.mulf %53, %58 : vector<8x128xf32>
    %60 = arith.addf %59, %46 : vector<8x128xf32>
    %61 = arith.truncf %60 : vector<8x128xf32> to vector<8x128xbf16>
    %c0_26 = arith.constant 0 : index
    %c0_27 = arith.constant 0 : index
    %62 = vector.load %arg6[%c0_26, %c0_27] : memref<128x128xbf16, #tpu.memory_space<vmem>>, vector<128x128xbf16>
    %cst_28 = arith.constant dense<0.000000e+00> : vector<8x128xf32>
    %63 = tpu.matmul %61, %62, %cst_28 {dimension_numbers = #tpu.dot_dimension_numbers<[1], [0], [0], [1], [0, 0, 1, 1], [], []>} : vector<8x128xbf16>, vector<128x128xbf16>, vector<8x128xf32> -> vector<8x128xf32>
    %c0_29 = arith.constant 0 : index
    %c0_30 = arith.constant 0 : index
    %64 = vector.load %arg7[%c0_29, %c0_30] : memref<1x128xf32, #tpu.memory_space<vmem>>, vector<1x128xf32>
    %65 = vector.broadcast %64 : vector<1x128xf32> to vector<8x128xf32>
    %66 = arith.addf %63, %65 : vector<8x128xf32>
    %c0_31 = arith.constant 0 : index
    %c0_32 = arith.constant 0 : index
    %67 = vector.load %arg8[%c0_31, %c0_32] : memref<8x128xf32, #tpu.memory_space<vmem>>, vector<8x128xf32>
    tpu.vector_store %arg8[%c0_31, %c0_32], %66 {strides = array<i32>} : memref<8x128xf32, #tpu.memory_space<vmem>>, vector<8x128xf32>,
    return
  }
  func.func @transform_0(%arg0: i32) -> (i32, i32) {
    %c0_i32 = arith.constant 0 : i32
    %c0_i32_0 = arith.constant 0 : i32
    return %arg0, %c0_i32 : i32, i32
  }
  func.func @transform_1(%arg0: i32) -> (i32, i32) {
    %c0_i32 = arith.constant 0 : i32
    %c0_i32_0 = arith.constant 0 : i32
    %c0_i32_1 = arith.constant 0 : i32
    return %c0_i32, %c0_i32_0 : i32, i32
  }
  func.func @transform_2(%arg0: i32) -> (i32, i32) {
    %c0_i32 = arith.constant 0 : i32
    %c0_i32_0 = arith.constant 0 : i32
    %c0_i32_1 = arith.constant 0 : i32
    return %c0_i32, %c0_i32_0 : i32, i32
  }
  func.func @transform_3(%arg0: i32) -> (i32, i32) {
    %c0_i32 = arith.constant 0 : i32
    %c0_i32_0 = arith.constant 0 : i32
    %c0_i32_1 = arith.constant 0 : i32
    return %c0_i32, %c0_i32_0 : i32, i32
  }
  func.func @transform_4(%arg0: i32) -> (i32, i32) {
    %c0_i32 = arith.constant 0 : i32
    %c0_i32_0 = arith.constant 0 : i32
    %c0_i32_1 = arith.constant 0 : i32
    return %c0_i32, %c0_i32_0 : i32, i32
  }
  func.func @transform_5(%arg0: i32) -> (i32, i32) {
    %c0_i32 = arith.constant 0 : i32
    %c0_i32_0 = arith.constant 0 : i32
    %c0_i32_1 = arith.constant 0 : i32
    return %c0_i32, %c0_i32_0 : i32, i32
  }
  func.func @transform_6(%arg0: i32) -> (i32, i32) {
    %c0_i32 = arith.constant 0 : i32
    %c0_i32_0 = arith.constant 0 : i32
    %c0_i32_1 = arith.constant 0 : i32
    return %c0_i32, %c0_i32_0 : i32, i32
  }
  func.func @transform_7(%arg0: i32) -> (i32, i32) {
    %c0_i32 = arith.constant 0 : i32
    %c0_i32_0 = arith.constant 0 : i32
    return %arg0, %c0_i32 : i32, i32
  }
}

module attributes {stable_mosaic.version = 11 : i64} {
  func.func @_head_kernel(%arg0: i32, %arg1: memref<8x128xbf16, #tpu.memory_space<vmem>>, %arg2: memref<128x128xbf16, #tpu.memory_space<vmem>>, %arg3: memref<8x128xf32, #tpu.memory_space<vmem>>, %arg4: memref<128x128xbf16, #tpu.memory_space<vmem>>, %arg5: memref<128x128xbf16, #tpu.memory_space<vmem>>, %arg6: memref<128x128xbf16, #tpu.memory_space<vmem>>, %arg7: memref<1x128xf32, #tpu.memory_space<vmem>>, %arg8: memref<8x128xf32, #tpu.memory_space<vmem>>) attributes {dimension_semantics = [#tpu.dimension_semantics<parallel>], iteration_bounds = array<i64: 1>, scalar_prefetch = 0 : i64, scratch_operands = 0 : i64, tpu.core_type = #tpu.core_type<tc>, window_params = [{transform_indices = @transform_0, window_bounds = array<i64: 8, 128>}, {pipeline_mode = #tpu.pipeline_mode<synchronous>, transform_indices = @transform_1, window_bounds = array<i64: 128, 128>}, {pipeline_mode = #tpu.pipeline_mode<synchronous>, transform_indices = @transform_2, window_bounds = array<i64: 8, 128>}, {pipeline_mode = #tpu.pipeline_mode<synchronous>, transform_indices = @transform_3, window_bounds = array<i64: 128, 128>}, {pipeline_mode = #tpu.pipeline_mode<synchronous>, transform_indices = @transform_4, window_bounds = array<i64: 128, 128>}, {pipeline_mode = #tpu.pipeline_mode<synchronous>, transform_indices = @transform_5, window_bounds = array<i64: 128, 128>}, {pipeline_mode = #tpu.pipeline_mode<synchronous>, transform_indices = @transform_6, window_bounds = array<i64: 1, 128>}, {transform_indices = @transform_7, window_bounds = array<i64: 8, 128>}]} {
    %c0 = arith.constant 0 : index
    %c0_0 = arith.constant 0 : index
    %0 = vector.load %arg3[%c0, %c0_0] : memref<8x128xf32, #tpu.memory_space<vmem>>, vector<1x128xf32>
    %c1 = arith.constant 1 : index
    %c0_1 = arith.constant 0 : index
    %1 = vector.load %arg3[%c1, %c0_1] : memref<8x128xf32, #tpu.memory_space<vmem>>, vector<1x128xf32>
    %c2 = arith.constant 2 : index
    %c0_2 = arith.constant 0 : index
    %2 = vector.load %arg3[%c2, %c0_2] : memref<8x128xf32, #tpu.memory_space<vmem>>, vector<1x128xf32>
    %c3 = arith.constant 3 : index
    %c0_3 = arith.constant 0 : index
    %3 = vector.load %arg3[%c3, %c0_3] : memref<8x128xf32, #tpu.memory_space<vmem>>, vector<1x128xf32>
    %c4 = arith.constant 4 : index
    %c0_4 = arith.constant 0 : index
    %4 = vector.load %arg3[%c4, %c0_4] : memref<8x128xf32, #tpu.memory_space<vmem>>, vector<1x128xf32>
    %c0_5 = arith.constant 0 : index
    %c0_6 = arith.constant 0 : index
    %5 = vector.load %arg1[%c0_5, %c0_6] : memref<8x128xbf16, #tpu.memory_space<vmem>>, vector<8x128xbf16>
    %c0_7 = arith.constant 0 : index
    %c0_8 = arith.constant 0 : index
    %6 = vector.load %arg2[%c0_7, %c0_8] : memref<128x128xbf16, #tpu.memory_space<vmem>>, vector<128x128xbf16>
    %cst = arith.constant dense<0.000000e+00> : vector<8x128xf32>
    %7 = tpu.matmul %5, %6, %cst {dimension_numbers = #tpu.dot_dimension_numbers<[1], [0], [0], [1], [0, 0, 1, 1], [], []>} : vector<8x128xbf16>, vector<128x128xbf16>, vector<8x128xf32> -> vector<8x128xf32>
    %8 = vector.broadcast %0 : vector<1x128xf32> to vector<8x128xf32>
    %9 = arith.addf %7, %8 : vector<8x128xf32>
    %10 = math.tanh %9 : vector<8x128xf32>
    %cst_9 = arith.constant dense<0.000000e+00> : vector<8xf32>
    %11 = vector.multi_reduction <add>, %10, %cst_9 [1] : vector<8x128xf32> to vector<8xf32>
    %12 = vector.shape_cast %11 : vector<8xf32> to vector<8x1xf32>
    %13 = arith.mulf %10, %10 : vector<8x128xf32>
    %cst_10 = arith.constant dense<0.000000e+00> : vector<8xf32>
    %14 = vector.multi_reduction <add>, %13, %cst_10 [1] : vector<8x128xf32> to vector<8xf32>
    %15 = vector.shape_cast %14 : vector<8xf32> to vector<8x1xf32>
    %cst_11 = arith.constant 3.125000e-02 : f32
    %16 = vector.broadcast %cst_11 : f32 to vector<8x1xf32>
    %17 = arith.mulf %12, %16 : vector<8x1xf32>
    %cst_12 = arith.constant 3.125000e-02 : f32
    %18 = vector.broadcast %cst_12 : f32 to vector<8x1xf32>
    %19 = arith.mulf %15, %18 : vector<8x1xf32>
    %20 = arith.mulf %17, %17 : vector<8x1xf32>
    %21 = arith.subf %19, %20 : vector<8x1xf32>
    %22 = vector.broadcast %17 : vector<8x1xf32> to vector<8x128xf32>
    %23 = arith.subf %10, %22 : vector<8x128xf32>
    %cst_13 = arith.constant 9.99999974E-6 : f32
    %24 = vector.broadcast %cst_13 : f32 to vector<8x1xf32>
    %25 = arith.addf %21, %24 : vector<8x1xf32>
    %26 = math.rsqrt %25 : vector<8x1xf32>
    %27 = vector.broadcast %26 : vector<8x1xf32> to vector<8x128xf32>
    %28 = arith.mulf %23, %27 : vector<8x128xf32>
    %29 = vector.broadcast %1 : vector<1x128xf32> to vector<8x128xf32>
    %30 = arith.mulf %28, %29 : vector<8x128xf32>
    %31 = vector.broadcast %2 : vector<1x128xf32> to vector<8x128xf32>
    %32 = arith.addf %30, %31 : vector<8x128xf32>
    %33 = arith.truncf %32 : vector<8x128xf32> to vector<8x128xbf16>
    %c0_14 = arith.constant 0 : index
    %c0_15 = arith.constant 0 : index
    %34 = vector.load %arg4[%c0_14, %c0_15] : memref<128x128xbf16, #tpu.memory_space<vmem>>, vector<128x128xbf16>
    %cst_16 = arith.constant dense<0.000000e+00> : vector<8x128xf32>
    %35 = tpu.matmul %33, %34, %cst_16 {dimension_numbers = #tpu.dot_dimension_numbers<[1], [0], [0], [1], [0, 0, 1, 1], [], []>} : vector<8x128xbf16>, vector<128x128xbf16>, vector<8x128xf32> -> vector<8x128xf32>
    %36 = vector.broadcast %3 : vector<1x128xf32> to vector<8x128xf32>
    %37 = arith.addf %35, %36 : vector<8x128xf32>
    %cst_17 = arith.constant 5.000000e-01 : f32
    %38 = vector.broadcast %cst_17 : f32 to vector<8x128xf32>
    %39 = arith.mulf %38, %37 : vector<8x128xf32>
    %cst_18 = arith.constant 0.707106769 : f32
    %40 = vector.broadcast %cst_18 : f32 to vector<8x128xf32>
    %41 = arith.mulf %37, %40 : vector<8x128xf32>
    %42 = math.erf %41 : vector<8x128xf32>
    %cst_19 = arith.constant 1.000000e+00 : f32
    %43 = vector.broadcast %cst_19 : f32 to vector<8x128xf32>
    %44 = arith.addf %43, %42 : vector<8x128xf32>
    %45 = arith.mulf %39, %44 : vector<8x128xf32>
    %46 = arith.addf %45, %32 : vector<8x128xf32>
    %47 = arith.truncf %46 : vector<8x128xf32> to vector<8x128xbf16>
    %c0_20 = arith.constant 0 : index
    %c0_21 = arith.constant 0 : index
    %48 = vector.load %arg5[%c0_20, %c0_21] : memref<128x128xbf16, #tpu.memory_space<vmem>>, vector<128x128xbf16>
    %cst_22 = arith.constant dense<0.000000e+00> : vector<8x128xf32>
    %49 = tpu.matmul %47, %48, %cst_22 {dimension_numbers = #tpu.dot_dimension_numbers<[1], [0], [0], [1], [0, 0, 1, 1], [], []>} : vector<8x128xbf16>, vector<128x128xbf16>, vector<8x128xf32> -> vector<8x128xf32>
    %50 = vector.broadcast %4 : vector<1x128xf32> to vector<8x128xf32>
    %51 = arith.addf %49, %50 : vector<8x128xf32>
    %cst_23 = arith.constant 5.000000e-01 : f32
    %52 = vector.broadcast %cst_23 : f32 to vector<8x128xf32>
    %53 = arith.mulf %52, %51 : vector<8x128xf32>
    %cst_24 = arith.constant 0.707106769 : f32
    %54 = vector.broadcast %cst_24 : f32 to vector<8x128xf32>
    %55 = arith.mulf %51, %54 : vector<8x128xf32>
    %56 = math.erf %55 : vector<8x128xf32>
    %cst_25 = arith.constant 1.000000e+00 : f32
    %57 = vector.broadcast %cst_25 : f32 to vector<8x128xf32>
    %58 = arith.addf %57, %56 : vector<8x128xf32>
    %59 = arith.mulf %53, %58 : vector<8x128xf32>
    %60 = arith.addf %59, %46 : vector<8x128xf32>
    %61 = arith.truncf %60 : vector<8x128xf32> to vector<8x128xbf16>
    %c0_26 = arith.constant 0 : index
    %c0_27 = arith.constant 0 : index
    %62 = vector.load %arg6[%c0_26, %c0_27] : memref<128x128xbf16, #tpu.memory_space<vmem>>, vector<128x128xbf16>
    %cst_28 = arith.constant dense<0.000000e+00> : vector<8x128xf32>
    %63 = tpu.matmul %61, %62, %cst_28 {dimension_numbers = #tpu.dot_dimension_numbers<[1], [0], [0], [1], [0, 0, 1, 1], [], []>} : vector<8x128xbf16>, vector<128x128xbf16>, vector<8x128xf32> -> vector<8x128xf32>
    %c0_29 = arith.constant 0 : index
    %c0_30 = arith.constant 0 : index
    %64 = vector.load %arg7[%c0_29, %c0_30] : memref<1x128xf32, #tpu.memory_space<vmem>>, vector<1x128xf32>
    %65 = vector.broadcast %64 : vector<1x128xf32> to vector<8x128xf32>
    %66 = arith.addf %63, %65 : vector<8x128xf32>
    %c0_31 = arith.constant 0 : index
    %c0_32 = arith.constant 0 : index
    %67 = vector.load %arg8[%c0_31, %c0_32] : memref<8x128xf32, #tpu.memory_space<vmem>>, vector<8x128xf32>
    tpu.vector_store %arg8[%c0_31, %c0_32], %66 {strides = array<i32>} : memref<8x128xf32, #tpu.memory_space<vmem>>, vector<8x128xf32>,
    return
  }
  func.func @transform_0(%arg0: i32) -> (i32, i32) {
    %c0_i32 = arith.constant 0 : i32
    %c0_i32_0 = arith.constant 0 : i32
    return %arg0, %c0_i32 : i32, i32
  }
  func.func @transform_1(%arg0: i32) -> (i32, i32) {
    %c0_i32 = arith.constant 0 : i32
    %c0_i32_0 = arith.constant 0 : i32
    %c0_i32_1 = arith.constant 0 : i32
    return %c0_i32, %c0_i32_0 : i32, i32
  }
  func.func @transform_2(%arg0: i32) -> (i32, i32) {
    %c0_i32 = arith.constant 0 : i32
    %c0_i32_0 = arith.constant 0 : i32
    %c0_i32_1 = arith.constant 0 : i32
    return %c0_i32, %c0_i32_0 : i32, i32
  }
  func.func @transform_3(%arg0: i32) -> (i32, i32) {
    %c0_i32 = arith.constant 0 : i32
    %c0_i32_0 = arith.constant 0 : i32
    %c0_i32_1 = arith.constant 0 : i32
    return %c0_i32, %c0_i32_0 : i32, i32
  }
  func.func @transform_4(%arg0: i32) -> (i32, i32) {
    %c0_i32 = arith.constant 0 : i32
    %c0_i32_0 = arith.constant 0 : i32
    %c0_i32_1 = arith.constant 0 : i32
    return %c0_i32, %c0_i32_0 : i32, i32
  }
  func.func @transform_5(%arg0: i32) -> (i32, i32) {
    %c0_i32 = arith.constant 0 : i32
    %c0_i32_0 = arith.constant 0 : i32
    %c0_i32_1 = arith.constant 0 : i32
    return %c0_i32, %c0_i32_0 : i32, i32
  }
  func.func @transform_6(%arg0: i32) -> (i32, i32) {
    %c0_i32 = arith.constant 0 : i32
    %c0_i32_0 = arith.constant 0 : i32
    %c0_i32_1 = arith.constant 0 : i32
    return %c0_i32, %c0_i32_0 : i32, i32
  }
  func.func @transform_7(%arg0: i32) -> (i32, i32) {
    %c0_i32 = arith.constant 0 : i32
    %c0_i32_0 = arith.constant 0 : i32
    return %arg0, %c0_i32 : i32, i32
  }
}

</mosaic_0001>

<llo_original>
// kernel: _head_call.1
$region0: #{_head_call.1}
  #allocation0 [shape = 'u32[]', space=smem, size = 0x4, offset = 0x4, fixed_abs, tag = 'smem constant byte address 0x4 - core index']
  #allocation1 [shape = 'u32[144,128]{1,0:T(1,128)}', space=vmem, size = 0x12000, scoped, tag = 'internal scratch']
  %s0 = inlined_call_operand.vmem [shape: bf16[8,128], index: 0, kind: input, shape index: {}]
  %s1 = inlined_call_operand.hbm [shape: bf16[128,128], index: 1, kind: input, shape index: {}]
  %s2 = inlined_call_operand.vmem [shape: f32[8,128], index: 2, kind: input, shape index: {}]
  %s3 = inlined_call_operand.hbm [shape: bf16[128,128], index: 3, kind: input, shape index: {}]
  %s4 = inlined_call_operand.hbm [shape: bf16[128,128], index: 4, kind: input, shape index: {}]
  %s5 = inlined_call_operand.hbm [shape: bf16[128,128], index: 5, kind: input, shape index: {}]
  %s6 = inlined_call_operand.vmem [shape: f32[1,128], index: 6, kind: input, shape index: {}]
  %s7 = inlined_call_operand.vmem [shape: f32[8,128], index: 7, kind: output, shape index: {}]
  %s8 = sld [smem:[#allocation0]]
  $region54: #{_head_call.1} parent=0
    _
  %s10 = ssub.s32 1, %s8
  %s11 = scalar_select 0, %s10, %s8
  $region1: #{_head_call.1} parent=0
    #allocation2 [shape = 'u8[32768]{0}', space=vmem, size = 0x8000, scoped, tag = 'input window, operand 1, single buffered']
    #allocation3 [shape = 's32[1]{0}', space=sflag, size = 0x4, scoped, tag = 'scoped memory for _head_call.1']
    #allocation4 [shape = 'u8[32768]{0}', space=vmem, size = 0x8000, scoped, tag = 'input window, operand 3, single buffered']
    #allocation5 [shape = 's32[1]{0}', space=sflag, size = 0x4, scoped, tag = 'scoped memory for _head_call.1']
    #allocation6 [shape = 'u8[32768]{0}', space=vmem, size = 0x8000, scoped, tag = 'input window, operand 4, single buffered']
    #allocation7 [shape = 'u8[32768]{0}', space=vmem, size = 0x8000, scoped, tag = 'input window, operand 5, single buffered']
    #allocation8 [shape = 's32[1]{0}', space=sflag, size = 0x4, scoped, tag = 'scoped memory for _head_call.1']
    %12 = vsyncpa [#allocation3], 0
    %13 = vsyncpa [#allocation5], 0
    %14 = vsyncpa [#allocation8], 0
    // Predicated region
    $region2: #{_head_call.1} parent=1 // pred_check
      _
    $region3: #{_head_call.1} parent=1 // pred_check_branch
      %16 = sbr.rel (0) target = $region5
    $region4: #{_head_call.1} parent=1 // pred_region
      _
    $region5: #{_head_call.1} parent=1 // pred_fallthru
      _
    // Predicated region
    $region6: #{_head_call.1} parent=1 // pred_check
      _
    $region7: #{_head_call.1} parent=1 // pred_check_branch
      %18 = sbr.rel (0) target = $region9
    $region8: #{_head_call.1} parent=1 // pred_region
      %s20 = ssub.s32 1024, 1024
      %21 = vsyncadd [#allocation3], %s20
      %s22 = sshll.u32 [#allocation2], 4
      %s23 = int_to_ptr.vmem [resolvable:$true] %s22
      %28 = dma.hbm_to_vmem [thread:$0]  %s1, 1024, %s23, [#allocation3], 64, 64, 4
    $region9: #{_head_call.1} parent=1 // pred_fallthru
      _
    // Predicated region
    $region10: #{_head_call.1} parent=1 // pred_check
      _
    $region11: #{_head_call.1} parent=1 // pred_check_branch
      %30 = sbr.rel (0) target = $region13
    $region12: #{_head_call.1} parent=1 // pred_region
      _
    $region13: #{_head_call.1} parent=1 // pred_fallthru
      _
    // Predicated region
    $region14: #{_head_call.1} parent=1 // pred_check
      _
    $region15: #{_head_call.1} parent=1 // pred_check_branch
      %32 = sbr.rel (0) target = $region17
    $region16: #{_head_call.1} parent=1 // pred_region
      %s34 = ssub.s32 1024, 1024
      %35 = vsyncadd [#allocation5], %s34
      %s36 = sshll.u32 [#allocation4], 4
      %s37 = int_to_ptr.vmem [resolvable:$true] %s36
      %42 = dma.hbm_to_vmem [thread:$0]  %s3, 1024, %s37, [#allocation5], 64, 64, 4
    $region17: #{_head_call.1} parent=1 // pred_fallthru
      _
    // Predicated region
    $region18: #{_head_call.1} parent=1 // pred_check
      _
    $region19: #{_head_call.1} parent=1 // pred_check_branch
      %44 = sbr.rel (0) target = $region21
    $region20: #{_head_call.1} parent=1 // pred_region
      %s46 = ssub.s32 1024, 1024
      %47 = vsyncadd [#allocation5], %s46
      %s48 = sshll.u32 [#allocation6], 4
      %s49 = int_to_ptr.vmem [resolvable:$true] %s48
      %54 = dma.hbm_to_vmem [thread:$0]  %s4, 1024, %s49, [#allocation5], 64, 64, 4
    $region21: #{_head_call.1} parent=1 // pred_fallthru
      _
    // Predicated region
    $region22: #{_head_call.1} parent=1 // pred_check
      _
    $region23: #{_head_call.1} parent=1 // pred_check_branch
      %56 = sbr.rel (0) target = $region25
    $region24: #{_head_call.1} parent=1 // pred_region
      %s58 = ssub.s32 1024, 1024
      %59 = vsyncadd [#allocation8], %s58
      %s60 = sshll.u32 [#allocation7], 4
      %s61 = int_to_ptr.vmem [resolvable:$true] %s60
      %66 = dma.hbm_to_vmem [thread:$0]  %s5, 1024, %s61, [#allocation8], 64, 64, 4
    $region25: #{_head_call.1} parent=1 // pred_fallthru
      _
    // Predicated region
    $region26: #{_head_call.1} parent=1 // pred_check
      _
    $region27: #{_head_call.1} parent=1 // pred_check_branch
      %68 = sbr.rel (0) target = $region29
    $region28: #{_head_call.1} parent=1 // pred_region
      _
    $region29: #{_head_call.1} parent=1 // pred_fallthru
      _
    // Predicated region
    $region30: #{_head_call.1} parent=1 // pred_check
      _
    $region31: #{_head_call.1} parent=1 // pred_check_branch
      %70 = sbr.rel (0) target = $region33
    $region32: #{_head_call.1} parent=1 // pred_region
      %71 = dma.done [#allocation3], 1024
    $region33: #{_head_call.1} parent=1 // pred_fallthru
      _
    // Predicated region
    $region34: #{_head_call.1} parent=1 // pred_check
      _
    $region35: #{_head_call.1} parent=1 // pred_check_branch
      %73 = sbr.rel (0) target = $region37
    $region36: #{_head_call.1} parent=1 // pred_region
      %74 = dma.done [#allocation5], 1024
    $region37: #{_head_call.1} parent=1 // pred_fallthru
      _
    // Predicated region
    $region38: #{_head_call.1} parent=1 // pred_check
      _
    $region39: #{_head_call.1} parent=1 // pred_check_branch
      %76 = sbr.rel (0) target = $region41
    $region40: #{_head_call.1} parent=1 // pred_region
      %77 = dma.done [#allocation5], 1024
    $region41: #{_head_call.1} parent=1 // pred_fallthru
      _
    // Predicated region
    $region42: #{_head_call.1} parent=1 // pred_check
      _
    $region43: #{_head_call.1} parent=1 // pred_check_branch
      %79 = sbr.rel (0) target = $region45
    $region44: #{_head_call.1} parent=1 // pred_region
      %80 = dma.done [#allocation8], 1024
    $region45: #{_head_call.1} parent=1 // pred_fallthru
      _
    %v82 = vld [vmem:[%s2] sm:$0x1]
    %v83 = vld [vmem:[%s2 + $0x1] sm:$0x1]
    %v84 = vld [vmem:[%s2 + $0x2] sm:$0x1]
    %v85 = vld [vmem:[%s2 + $0x3] sm:$0x1]
    %v86 = vld [vmem:[%s2 + $0x4] sm:$0x1]
    %v87 = vld [vmem:[%s0] sm:$0xf]
    %v88 = vld [vmem:[#allocation2] sm:$0xf]
    %v89 = vld [vmem:[#allocation2 + $0x4] sm:$0xf]
    %v90 = vld [vmem:[#allocation2 + $0x8] sm:$0xf]
    %v91 = vld [vmem:[#allocation2 + $0xc] sm:$0xf]
    %v92 = vld [vmem:[#allocation2 + $0x10] sm:$0xf]
    %v93 = vld [vmem:[#allocation2 + $0x14] sm:$0xf]
    %v94 = vld [vmem:[#allocation2 + $0x18] sm:$0xf]
    %v95 = vld [vmem:[#allocation2 + $0x1c] sm:$0xf]
    %v96 = vld [vmem:[#allocation2 + $0x20] sm:$0xf]
    %v97 = vld [vmem:[#allocation2 + $0x24] sm:$0xf]
    %v98 = vld [vmem:[#allocation2 + $0x28] sm:$0xf]
    %v99 = vld [vmem:[#allocation2 + $0x2c] sm:$0xf]
    %v100 = vld [vmem:[#allocation2 + $0x30] sm:$0xf]
    %v101 = vld [vmem:[#allocation2 + $0x34] sm:$0xf]
    %v102 = vld [vmem:[#allocation2 + $0x38] sm:$0xf]
    %v103 = vld [vmem:[#allocation2 + $0x3c] sm:$0xf]
    %v104 = vlaneseq
    %v105 = vshrl.u32 %v104, 7
    %v106 = vsub.s32 0, %v105
    %v107 = vrot.slane %v82, %v106
    %v124 = vunpack.c.l.b16 %v88
    %v125 = vunpack.c.l.b16 %v89
    %v126 = vunpack.c.l.b16 %v90
    %v127 = vunpack.c.l.b16 %v91
    %v128 = vunpack.c.l.b16 %v92
    %v129 = vunpack.c.l.b16 %v93
    %v130 = vunpack.c.l.b16 %v94
    %v131 = vunpack.c.l.b16 %v95
    %v132 = vunpack.c.l.b16 %v96
    %v133 = vunpack.c.l.b16 %v97
    %v134 = vunpack.c.l.b16 %v98
    %v135 = vunpack.c.l.b16 %v99
    %v136 = vunpack.c.l.b16 %v100
    %v137 = vunpack.c.l.b16 %v101
    %v138 = vunpack.c.l.b16 %v102
    %v139 = vunpack.c.l.b16 %v103
    %v140 = vpack.c.b16 %v125, %v124
    %v141 = vpack.c.b16 %v127, %v126
    %v142 = vpack.c.b16 %v129, %v128
    %v143 = vpack.c.b16 %v131, %v130
    %v144 = vpack.c.b16 %v133, %v132
    %v145 = vpack.c.b16 %v135, %v134
    %v146 = vpack.c.b16 %v137, %v136
    %v147 = vpack.c.b16 %v139, %v138
    %156 = vmatprep.subr.bf16.mxu0 0
    %157 = vmatpush1.bf16.msra.mxu0 %v147
    %158 = vmatprep.subr.bf16.mxu0 0
    %159 = vmatpush1.bf16.msra.mxu0 %v146
    %160 = vmatprep.subr.bf16.mxu0 0
    %161 = vmatpush1.bf16.msra.mxu0 %v145
    %162 = vmatprep.subr.bf16.mxu0 0
    %163 = vmatpush1.bf16.msra.mxu0 %v144
    %164 = vmatprep.subr.bf16.mxu0 0
    %165 = vmatpush1.bf16.msra.mxu0 %v143
    %166 = vmatprep.subr.bf16.mxu0 0
    %167 = vmatpush1.bf16.msra.mxu0 %v142
    %168 = vmatprep.subr.bf16.mxu0 0
    %169 = vmatpush1.bf16.msra.mxu0 %v141
    %170 = vmatprep.subr.bf16.mxu0 0
    %171 = vmatpush1.bf16.msra.mxu0 %v140
    %172 = vmatprep.subr.bf16.mxu0 0
    %173 = vmatpush2.bf16.msra.mxu0 0
    %174 = vmatprep.subr.bf16.mxu0 0
    %175 = vmatpush2.bf16.msra.mxu0 0
    %176 = vmatprep.subr.bf16.mxu0 0
    %177 = vmatpush2.bf16.msra.mxu0 0
    %178 = vmatprep.subr.bf16.mxu0 0
    %179 = vmatpush2.bf16.msra.mxu0 0
    %180 = vmatprep.subr.bf16.mxu0 0
    %181 = vmatpush2.bf16.msra.mxu0 0
    %182 = vmatprep.subr.bf16.mxu0 0
    %183 = vmatpush2.bf16.msra.mxu0 0
    %184 = vmatprep.subr.bf16.mxu0 0
    %185 = vmatpush2.bf16.msra.mxu0 0
    %186 = vmatprep.subr.bf16.mxu0 0
    %187 = vmatpush2.bf16.msra.mxu0 0
    %188 = vmatprep.mubr.bf16.mxu0 0
    %189 = vmatmul.mubr.bf16.gmra.mxu0 %v87
    %v190 = vpop.f32.mrf.mxu0
    %v191 = vadd.f32 %v107, %v190
    %v192 = vpop.f32.mrf.mxu0
    %v193 = vpop.f32.mrf.mxu0
    %v194 = vpop.f32.mrf.mxu0
    %195 = vdwg.mxu0
    %v196 = vtanh.pop %v191
    %197 = vadd.xlane.f32.xlu0 %v196
    %v198 = vpop.xlane.xlu0 %197
    %v199 = vmul.f32 %v196, %v196
    %200 = vadd.xlane.f32.xlu0 %v199
    %v201 = vpop.xlane.xlu0 %200
    %v202 = vmul.f32 %v198, 0.03125
    %v203 = vmul.f32 %v201, 0.03125
    %v204 = vmul.f32 %v202, %v202
    %v205 = vsub.f32 %v203, %v204
    %v206 = vsub.f32 %v196, %v202
    %v207 = vadd.f32 %v205, 1e-05
    %v208 = vrsqrt.pop %v207
    %v209 = vmul.f32 %v206, %v208
    %v210 = vlaneseq
    %v211 = vshrl.u32 %v210, 7
    %v212 = vsub.s32 0, %v211
    %v213 = vrot.slane %v83, %v212
    %v214 = vmul.f32 %v209, %v213
    %v215 = vlaneseq
    %v216 = vshrl.u32 %v215, 7
    %v217 = vsub.s32 0, %v216
    %v218 = vrot.slane %v84, %v217
    %v219 = vadd.f32 %v214, %v218
    %v220 = vpack.c.bf16 %v219, %v219
    %v221 = vld [vmem:[#allocation4] sm:$0xf]
    %v222 = vld [vmem:[#allocation4 + $0x4] sm:$0xf]
    %v223 = vld [vmem:[#allocation4 + $0x8] sm:$0xf]
    %v224 = vld [vmem:[#allocation4 + $0xc] sm:$0xf]
    %v225 = vld [vmem:[#allocation4 + $0x10] sm:$0xf]
    %v226 = vld [vmem:[#allocation4 + $0x14] sm:$0xf]
    %v227 = vld [vmem:[#allocation4 + $0x18] sm:$0xf]
    %v228 = vld [vmem:[#allocation4 + $0x1c] sm:$0xf]
    %v229 = vld [vmem:[#allocation4 + $0x20] sm:$0xf]
    %v230 = vld [vmem:[#allocation4 + $0x24] sm:$0xf]
    %v231 = vld [vmem:[#allocation4 + $0x28] sm:$0xf]
    %v232 = vld [vmem:[#allocation4 + $0x2c] sm:$0xf]
    %v233 = vld [vmem:[#allocation4 + $0x30] sm:$0xf]
    %v234 = vld [vmem:[#allocation4 + $0x34] sm:$0xf]
    %v235 = vld [vmem:[#allocation4 + $0x38] sm:$0xf]
    %v236 = vld [vmem:[#allocation4 + $0x3c] sm:$0xf]
    %v237 = vlaneseq
    %v238 = vshrl.u32 %v237, 7
    %v239 = vsub.s32 0, %v238
    %v240 = vrot.slane %v85, %v239
    %v257 = vunpack.c.l.b16 %v221
    %v258 = vunpack.c.l.b16 %v222
    %v259 = vunpack.c.l.b16 %v223
    %v260 = vunpack.c.l.b16 %v224
    %v261 = vunpack.c.l.b16 %v225
    %v262 = vunpack.c.l.b16 %v226
    %v263 = vunpack.c.l.b16 %v227
    %v264 = vunpack.c.l.b16 %v228
    %v265 = vunpack.c.l.b16 %v229
    %v266 = vunpack.c.l.b16 %v230
    %v267 = vunpack.c.l.b16 %v231
    %v268 = vunpack.c.l.b16 %v232
    %v269 = vunpack.c.l.b16 %v233
    %v270 = vunpack.c.l.b16 %v234
    %v271 = vunpack.c.l.b16 %v235
    %v272 = vunpack.c.l.b16 %v236
    %v273 = vpack.c.b16 %v258, %v257
    %v274 = vpack.c.b16 %v260, %v259
    %v275 = vpack.c.b16 %v262, %v261
    %v276 = vpack.c.b16 %v264, %v263
    %v277 = vpack.c.b16 %v266, %v265
    %v278 = vpack.c.b16 %v268, %v267
    %v279 = vpack.c.b16 %v270, %v269
    %v280 = vpack.c.b16 %v272, %v271
    %289 = vmatprep.subr.bf16.mxu0 0
    %290 = vmatpush1.bf16.msra.mxu0 %v280
    %291 = vmatprep.subr.bf16.mxu0 0
    %292 = vmatpush1.bf16.msra.mxu0 %v279
    %293 = vmatprep.subr.bf16.mxu0 0
    %294 = vmatpush1.bf16.msra.mxu0 %v278
    %295 = vmatprep.subr.bf16.mxu0 0
    %296 = vmatpush1.bf16.msra.mxu0 %v277
    %297 = vmatprep.subr.bf16.mxu0 0
    %298 = vmatpush1.bf16.msra.mxu0 %v276
    %299 = vmatprep.subr.bf16.mxu0 0
    %300 = vmatpush1.bf16.msra.mxu0 %v275
    %301 = vmatprep.subr.bf16.mxu0 0
    %302 = vmatpush1.bf16.msra.mxu0 %v274
    %303 = vmatprep.subr.bf16.mxu0 0
    %304 = vmatpush1.bf16.msra.mxu0 %v273
    %305 = vmatprep.subr.bf16.mxu0 0
    %306 = vmatpush2.bf16.msra.mxu0 0
    %307 = vmatprep.subr.bf16.mxu0 0
    %308 = vmatpush2.bf16.msra.mxu0 0
    %309 = vmatprep.subr.bf16.mxu0 0
    %310 = vmatpush2.bf16.msra.mxu0 0
    %311 = vmatprep.subr.bf16.mxu0 0
    %312 = vmatpush2.bf16.msra.mxu0 0
    %313 = vmatprep.subr.bf16.mxu0 0
    %314 = vmatpush2.bf16.msra.mxu0 0
    %315 = vmatprep.subr.bf16.mxu0 0
    %316 = vmatpush2.bf16.msra.mxu0 0
    %317 = vmatprep.subr.bf16.mxu0 0
    %318 = vmatpush2.bf16.msra.mxu0 0
    %319 = vmatprep.subr.bf16.mxu0 0
    %320 = vmatpush2.bf16.msra.mxu0 0
    %321 = vmatprep.mubr.bf16.mxu0 0
    %322 = vmatmul.mubr.bf16.gmra.mxu0 %v220
    %v323 = vpop.f32.mrf.mxu0
    %v324 = vadd.f32 %v240, %v323
    %v325 = vpop.f32.mrf.mxu0
    %v326 = vpop.f32.mrf.mxu0
    %v327 = vpop.f32.mrf.mxu0
    %328 = vdwg.mxu0
    %v329 = vmul.f32 %v324, 0.5
    %v330 = vmul.f32 %v324, 0.70710677
    %v331 = verf.f32.pop %v330
    %v332 = vadd.f32 %v331, 1.0
    %v333 = vmul.f32 %v329, %v332
    %v334 = vadd.f32 %v333, %v219
    %v335 = vpack.c.bf16 %v334, %v334
    %v336 = vld [vmem:[#allocation6] sm:$0xf]
    %v337 = vld [vmem:[#allocation6 + $0x4] sm:$0xf]
    %v338 = vld [vmem:[#allocation6 + $0x8] sm:$0xf]
    %v339 = vld [vmem:[#allocation6 + $0xc] sm:$0xf]
    %v340 = vld [vmem:[#allocation6 + $0x10] sm:$0xf]
    %v341 = vld [vmem:[#allocation6 + $0x14] sm:$0xf]
    %v342 = vld [vmem:[#allocation6 + $0x18] sm:$0xf]
    %v343 = vld [vmem:[#allocation6 + $0x1c] sm:$0xf]
    %v344 = vld [vmem:[#allocation6 + $0x20] sm:$0xf]
    %v345 = vld [vmem:[#allocation6 + $0x24] sm:$0xf]
    %v346 = vld [vmem:[#allocation6 + $0x28] sm:$0xf]
    %v347 = vld [vmem:[#allocation6 + $0x2c] sm:$0xf]
    %v348 = vld [vmem:[#allocation6 + $0x30] sm:$0xf]
    %v349 = vld [vmem:[#allocation6 + $0x34] sm:$0xf]
    %v350 = vld [vmem:[#allocation6 + $0x38] sm:$0xf]
    %v351 = vld [vmem:[#allocation6 + $0x3c] sm:$0xf]
    %v352 = vlaneseq
    %v353 = vshrl.u32 %v352, 7
    %v354 = vsub.s32 0, %v353
    %v355 = vrot.slane %v86, %v354
    %v372 = vunpack.c.l.b16 %v336
    %v373 = vunpack.c.l.b16 %v337
    %v374 = vunpack.c.l.b16 %v338
    %v375 = vunpack.c.l.b16 %v339
    %v376 = vunpack.c.l.b16 %v340
    %v377 = vunpack.c.l.b16 %v341
    %v378 = vunpack.c.l.b16 %v342
    %v379 = vunpack.c.l.b16 %v343
    %v380 = vunpack.c.l.b16 %v344
    %v381 = vunpack.c.l.b16 %v345
    %v382 = vunpack.c.l.b16 %v346
    %v383 = vunpack.c.l.b16 %v347
    %v384 = vunpack.c.l.b16 %v348
    %v385 = vunpack.c.l.b16 %v349
    %v386 = vunpack.c.l.b16 %v350
    %v387 = vunpack.c.l.b16 %v351
    %v388 = vpack.c.b16 %v373, %v372
    %v389 = vpack.c.b16 %v375, %v374
    %v390 = vpack.c.b16 %v377, %v376
    %v391 = vpack.c.b16 %v379, %v378
    %v392 = vpack.c.b16 %v381, %v380
    %v393 = vpack.c.b16 %v383, %v382
    %v394 = vpack.c.b16 %v385, %v384
    %v395 = vpack.c.b16 %v387, %v386
    %404 = vmatprep.subr.bf16.mxu0 0
    %405 = vmatpush1.bf16.msra.mxu0 %v395
    %406 = vmatprep.subr.bf16.mxu0 0
    %407 = vmatpush1.bf16.msra.mxu0 %v394
    %408 = vmatprep.subr.bf16.mxu0 0
    %409 = vmatpush1.bf16.msra.mxu0 %v393
    %410 = vmatprep.subr.bf16.mxu0 0
    %411 = vmatpush1.bf16.msra.mxu0 %v392
    %412 = vmatprep.subr.bf16.mxu0 0
    %413 = vmatpush1.bf16.msra.mxu0 %v391
    %414 = vmatprep.subr.bf16.mxu0 0
    %415 = vmatpush1.bf16.msra.mxu0 %v390
    %416 = vmatprep.subr.bf16.mxu0 0
    %417 = vmatpush1.bf16.msra.mxu0 %v389
    %418 = vmatprep.subr.bf16.mxu0 0
    %419 = vmatpush1.bf16.msra.mxu0 %v388
    %420 = vmatprep.subr.bf16.mxu0 0
    %421 = vmatpush2.bf16.msra.mxu0 0
    %422 = vmatprep.subr.bf16.mxu0 0
    %423 = vmatpush2.bf16.msra.mxu0 0
    %424 = vmatprep.subr.bf16.mxu0 0
    %425 = vmatpush2.bf16.msra.mxu0 0
    %426 = vmatprep.subr.bf16.mxu0 0
    %427 = vmatpush2.bf16.msra.mxu0 0
    %428 = vmatprep.subr.bf16.mxu0 0
    %429 = vmatpush2.bf16.msra.mxu0 0
    %430 = vmatprep.subr.bf16.mxu0 0
    %431 = vmatpush2.bf16.msra.mxu0 0
    %432 = vmatprep.subr.bf16.mxu0 0
    %433 = vmatpush2.bf16.msra.mxu0 0
    %434 = vmatprep.subr.bf16.mxu0 0
    %435 = vmatpush2.bf16.msra.mxu0 0
    %436 = vmatprep.mubr.bf16.mxu0 0
    %437 = vmatmul.mubr.bf16.gmra.mxu0 %v335
    %v438 = vpop.f32.mrf.mxu0
    %v439 = vadd.f32 %v355, %v438
    %v440 = vpop.f32.mrf.mxu0
    %v441 = vpop.f32.mrf.mxu0
    %v442 = vpop.f32.mrf.mxu0
    %443 = vdwg.mxu0
    %v444 = vmul.f32 %v439, 0.5
    %v445 = vmul.f32 %v439, 0.70710677
    %v446 = verf.f32.pop %v445
    %v447 = vadd.f32 %v446, 1.0
    %v448 = vmul.f32 %v444, %v447
    %v449 = vadd.f32 %v448, %v334
    %v450 = vpack.c.bf16 %v449, %v449
    %v451 = vld [vmem:[#allocation7] sm:$0xf]
    %v452 = vld [vmem:[#allocation7 + $0x4] sm:$0xf]
    %v453 = vld [vmem:[#allocation7 + $0x8] sm:$0xf]
    %v454 = vld [vmem:[#allocation7 + $0xc] sm:$0xf]
    %v455 = vld [vmem:[#allocation7 + $0x10] sm:$0xf]
    %v456 = vld [vmem:[#allocation7 + $0x14] sm:$0xf]
    %v457 = vld [vmem:[#allocation7 + $0x18] sm:$0xf]
    %v458 = vld [vmem:[#allocation7 + $0x1c] sm:$0xf]
    %v459 = vld [vmem:[#allocation7 + $0x20] sm:$0xf]
    %v460 = vld [vmem:[#allocation7 + $0x24] sm:$0xf]
    %v461 = vld [vmem:[#allocation7 + $0x28] sm:$0xf]
    %v462 = vld [vmem:[#allocation7 + $0x2c] sm:$0xf]
    %v463 = vld [vmem:[#allocation7 + $0x30] sm:$0xf]
    %v464 = vld [vmem:[#allocation7 + $0x34] sm:$0xf]
    %v465 = vld [vmem:[#allocation7 + $0x38] sm:$0xf]
    %v466 = vld [vmem:[#allocation7 + $0x3c] sm:$0xf]
    %v467 = vld [vmem:[%s6] sm:$0x1]
    %v469 = vlaneseq
    %v470 = vshrl.u32 %v469, 7
    %v471 = vsub.s32 0, %v470
    %v472 = vrot.slane %v467, %v471
    %v490 = vunpack.c.l.b16 %v451
    %v491 = vunpack.c.l.b16 %v452
    %v492 = vunpack.c.l.b16 %v453
    %v493 = vunpack.c.l.b16 %v454
    %v494 = vunpack.c.l.b16 %v455
    %v495 = vunpack.c.l.b16 %v456
    %v496 = vunpack.c.l.b16 %v457
    %v497 = vunpack.c.l.b16 %v458
    %v498 = vunpack.c.l.b16 %v459
    %v499 = vunpack.c.l.b16 %v460
    %v500 = vunpack.c.l.b16 %v461
    %v501 = vunpack.c.l.b16 %v462
    %v502 = vunpack.c.l.b16 %v463
    %v503 = vunpack.c.l.b16 %v464
    %v504 = vunpack.c.l.b16 %v465
    %v505 = vunpack.c.l.b16 %v466
    %v506 = vpack.c.b16 %v491, %v490
    %v507 = vpack.c.b16 %v493, %v492
    %v508 = vpack.c.b16 %v495, %v494
    %v509 = vpack.c.b16 %v497, %v496
    %v510 = vpack.c.b16 %v499, %v498
    %v511 = vpack.c.b16 %v501, %v500
    %v512 = vpack.c.b16 %v503, %v502
    %v513 = vpack.c.b16 %v505, %v504
    %522 = vmatprep.subr.bf16.mxu0 0
    %523 = vmatpush1.bf16.msra.mxu0 %v513
    %524 = vmatprep.subr.bf16.mxu0 0
    %525 = vmatpush1.bf16.msra.mxu0 %v512
    %526 = vmatprep.subr.bf16.mxu0 0
    %527 = vmatpush1.bf16.msra.mxu0 %v511
    %528 = vmatprep.subr.bf16.mxu0 0
    %529 = vmatpush1.bf16.msra.mxu0 %v510
    %530 = vmatprep.subr.bf16.mxu0 0
    %531 = vmatpush1.bf16.msra.mxu0 %v509
    %532 = vmatprep.subr.bf16.mxu0 0
    %533 = vmatpush1.bf16.msra.mxu0 %v508
    %534 = vmatprep.subr.bf16.mxu0 0
    %535 = vmatpush1.bf16.msra.mxu0 %v507
    %536 = vmatprep.subr.bf16.mxu0 0
    %537 = vmatpush1.bf16.msra.mxu0 %v506
    %538 = vmatprep.subr.bf16.mxu0 0
    %539 = vmatpush2.bf16.msra.mxu0 0
    %540 = vmatprep.subr.bf16.mxu0 0
    %541 = vmatpush2.bf16.msra.mxu0 0
    %542 = vmatprep.subr.bf16.mxu0 0
    %543 = vmatpush2.bf16.msra.mxu0 0
    %544 = vmatprep.subr.bf16.mxu0 0
    %545 = vmatpush2.bf16.msra.mxu0 0
    %546 = vmatprep.subr.bf16.mxu0 0
    %547 = vmatpush2.bf16.msra.mxu0 0
    %548 = vmatprep.subr.bf16.mxu0 0
    %549 = vmatpush2.bf16.msra.mxu0 0
    %550 = vmatprep.subr.bf16.mxu0 0
    %551 = vmatpush2.bf16.msra.mxu0 0
    %552 = vmatprep.subr.bf16.mxu0 0
    %553 = vmatpush2.bf16.msra.mxu0 0
    %554 = vmatprep.mubr.bf16.mxu0 0
    %555 = vmatmul.mubr.bf16.gmra.mxu0 %v450
    %v556 = vpop.f32.mrf.mxu0
    %v557 = vadd.f32 %v472, %v556
    %v558 = vpop.f32.mrf.mxu0
    %v559 = vpop.f32.mrf.mxu0
    %v560 = vpop.f32.mrf.mxu0
    %561 = vdwg.mxu0
    %562 = vst [vmem:[%s7] sm:$0xff] %v557
    // Predicated region
    $region46: #{_head_call.1} parent=1 // pred_check
      _
    $region47: #{_head_call.1} parent=1 // pred_check_branch
      %564 = sbr.rel (0) target = $region49
    $region48: #{_head_call.1} parent=1 // pred_region
      _
    $region49: #{_head_call.1} parent=1 // pred_fallthru
      _
    // Predicated region
    $region50: #{_head_call.1} parent=1 // pred_check
      _
    $region51: #{_head_call.1} parent=1 // pred_check_branch
      %566 = sbr.rel (0) target = $region53
    $region52: #{_head_call.1} parent=1 // pred_region
      _
    $region53: #{_head_call.1} parent=1 // pred_fallthru
      _
    %567 = vsyncpa [#allocation3], 1
    %568 = vsyncpa [#allocation5], 1
    %569 = vsyncpa [#allocation8], 1

// kernel: _head_call.1
$region0: #{_head_call.1}
  #allocation0 [shape = 'u32[]', space=smem, size = 0x4, offset = 0x4, fixed_abs, tag = 'smem constant byte address 0x4 - core index']
  #allocation1 [shape = 'u32[144,128]{1,0:T(1,128)}', space=vmem, size = 0x12000, scoped, tag = 'internal scratch']
  %s0 = inlined_call_operand.vmem [shape: bf16[8,128], index: 0, kind: input, shape index: {}]
  %s1 = inlined_call_operand.hbm [shape: bf16[128,128], index: 1, kind: input, shape index: {}]
  %s2 = inlined_call_operand.vmem [shape: f32[8,128], index: 2, kind: input, shape index: {}]
  %s3 = inlined_call_operand.hbm [shape: bf16[128,128], index: 3, kind: input, shape index: {}]
  %s4 = inlined_call_operand.hbm [shape: bf16[128,128], index: 4, kind: input, shape index: {}]
  %s5 = inlined_call_operand.hbm [shape: bf16[128,128], index: 5, kind: input, shape index: {}]
  %s6 = inlined_call_operand.vmem [shape: f32[1,128], index: 6, kind: input, shape index: {}]
  %s7 = inlined_call_operand.vmem [shape: f32[8,128], index: 7, kind: output, shape index: {}]
  %s8 = sld [smem:[#allocation0]]
  $region54: #{_head_call.1} parent=0
    _
  %s10 = ssub.s32 1, %s8
  %s11 = scalar_select 0, %s10, %s8
  $region1: #{_head_call.1} parent=0
    #allocation2 [shape = 'u8[32768]{0}', space=vmem, size = 0x8000, scoped, tag = 'input window, operand 1, single buffered']
    #allocation3 [shape = 's32[1]{0}', space=sflag, size = 0x4, scoped, tag = 'scoped memory for _head_call.1']
    #allocation4 [shape = 'u8[32768]{0}', space=vmem, size = 0x8000, scoped, tag = 'input window, operand 3, single buffered']
    #allocation5 [shape = 's32[1]{0}', space=sflag, size = 0x4, scoped, tag = 'scoped memory for _head_call.1']
    #allocation6 [shape = 'u8[32768]{0}', space=vmem, size = 0x8000, scoped, tag = 'input window, operand 4, single buffered']
    #allocation7 [shape = 'u8[32768]{0}', space=vmem, size = 0x8000, scoped, tag = 'input window, operand 5, single buffered']
    #allocation8 [shape = 's32[1]{0}', space=sflag, size = 0x4, scoped, tag = 'scoped memory for _head_call.1']
    %12 = vsyncpa [#allocation3], 0
    %13 = vsyncpa [#allocation5], 0
    %14 = vsyncpa [#allocation8], 0
    // Predicated region
    $region2: #{_head_call.1} parent=1 // pred_check
      _
    $region3: #{_head_call.1} parent=1 // pred_check_branch
      %16 = sbr.rel (0) target = $region5
    $region4: #{_head_call.1} parent=1 // pred_region
      _
    $region5: #{_head_call.1} parent=1 // pred_fallthru
      _
    // Predicated region
    $region6: #{_head_call.1} parent=1 // pred_check
      _
    $region7: #{_head_call.1} parent=1 // pred_check_branch
      %18 = sbr.rel (0) target = $region9
    $region8: #{_head_call.1} parent=1 // pred_region
      %s20 = ssub.s32 1024, 1024
      %21 = vsyncadd [#allocation3], %s20
      %s22 = sshll.u32 [#allocation2], 4
      %s23 = int_to_ptr.vmem [resolvable:$true] %s22
      %28 = dma.hbm_to_vmem [thread:$0]  %s1, 1024, %s23, [#allocation3], 64, 64, 4
    $region9: #{_head_call.1} parent=1 // pred_fallthru
      _
    // Predicated region
    $region10: #{_head_call.1} parent=1 // pred_check
      _
    $region11: #{_head_call.1} parent=1 // pred_check_branch
      %30 = sbr.rel (0) target = $region13
    $region12: #{_head_call.1} parent=1 // pred_region
      _
    $region13: #{_head_call.1} parent=1 // pred_fallthru
      _
    // Predicated region
    $region14: #{_head_call.1} parent=1 // pred_check
      _
    $region15: #{_head_call.1} parent=1 // pred_check_branch
      %32 = sbr.rel (0) target = $region17
    $region16: #{_head_call.1} parent=1 // pred_region
      %s34 = ssub.s32 1024, 1024
      %35 = vsyncadd [#allocation5], %s34
      %s36 = sshll.u32 [#allocation4], 4
      %s37 = int_to_ptr.vmem [resolvable:$true] %s36
      %42 = dma.hbm_to_vmem [thread:$0]  %s3, 1024, %s37, [#allocation5], 64, 64, 4
    $region17: #{_head_call.1} parent=1 // pred_fallthru
      _
    // Predicated region
    $region18: #{_head_call.1} parent=1 // pred_check
      _
    $region19: #{_head_call.1} parent=1 // pred_check_branch
      %44 = sbr.rel (0) target = $region21
    $region20: #{_head_call.1} parent=1 // pred_region
      %s46 = ssub.s32 1024, 1024
      %47 = vsyncadd [#allocation5], %s46
      %s48 = sshll.u32 [#allocation6], 4
      %s49 = int_to_ptr.vmem [resolvable:$true] %s48
      %54 = dma.hbm_to_vmem [thread:$0]  %s4, 1024, %s49, [#allocation5], 64, 64, 4
    $region21: #{_head_call.1} parent=1 // pred_fallthru
      _
    // Predicated region
    $region22: #{_head_call.1} parent=1 // pred_check
      _
    $region23: #{_head_call.1} parent=1 // pred_check_branch
      %56 = sbr.rel (0) target = $region25
    $region24: #{_head_call.1} parent=1 // pred_region
      %s58 = ssub.s32 1024, 1024
      %59 = vsyncadd [#allocation8], %s58
      %s60 = sshll.u32 [#allocation7], 4
      %s61 = int_to_ptr.vmem [resolvable:$true] %s60
      %66 = dma.hbm_to_vmem [thread:$0]  %s5, 1024, %s61, [#allocation8], 64, 64, 4
    $region25: #{_head_call.1} parent=1 // pred_fallthru
      _
    // Predicated region
    $region26: #{_head_call.1} parent=1 // pred_check
      _
    $region27: #{_head_call.1} parent=1 // pred_check_branch
      %68 = sbr.rel (0) target = $region29
    $region28: #{_head_call.1} parent=1 // pred_region
      _
    $region29: #{_head_call.1} parent=1 // pred_fallthru
      _
    // Predicated region
    $region30: #{_head_call.1} parent=1 // pred_check
      _
    $region31: #{_head_call.1} parent=1 // pred_check_branch
      %70 = sbr.rel (0) target = $region33
    $region32: #{_head_call.1} parent=1 // pred_region
      %71 = dma.done [#allocation3], 1024
    $region33: #{_head_call.1} parent=1 // pred_fallthru
      _
    // Predicated region
    $region34: #{_head_call.1} parent=1 // pred_check
      _
    $region35: #{_head_call.1} parent=1 // pred_check_branch
      %73 = sbr.rel (0) target = $region37
    $region36: #{_head_call.1} parent=1 // pred_region
      %74 = dma.done [#allocation5], 1024
    $region37: #{_head_call.1} parent=1 // pred_fallthru
      _
    // Predicated region
    $region38: #{_head_call.1} parent=1 // pred_check
      _
    $region39: #{_head_call.1} parent=1 // pred_check_branch
      %76 = sbr.rel (0) target = $region41
    $region40: #{_head_call.1} parent=1 // pred_region
      %77 = dma.done [#allocation5], 1024
    $region41: #{_head_call.1} parent=1 // pred_fallthru
      _
    // Predicated region
    $region42: #{_head_call.1} parent=1 // pred_check
      _
    $region43: #{_head_call.1} parent=1 // pred_check_branch
      %79 = sbr.rel (0) target = $region45
    $region44: #{_head_call.1} parent=1 // pred_region
      %80 = dma.done [#allocation8], 1024
    $region45: #{_head_call.1} parent=1 // pred_fallthru
      _
    %v82 = vld [vmem:[%s2] sm:$0x1]
    %v83 = vld [vmem:[%s2 + $0x1] sm:$0x1]
    %v84 = vld [vmem:[%s2 + $0x2] sm:$0x1]
    %v85 = vld [vmem:[%s2 + $0x3] sm:$0x1]
    %v86 = vld [vmem:[%s2 + $0x4] sm:$0x1]
    %v87 = vld [vmem:[%s0] sm:$0xf]
    %v88 = vld [vmem:[#allocation2] sm:$0xf]
    %v89 = vld [vmem:[#allocation2 + $0x4] sm:$0xf]
    %v90 = vld [vmem:[#allocation2 + $0x8] sm:$0xf]
    %v91 = vld [vmem:[#allocation2 + $0xc] sm:$0xf]
    %v92 = vld [vmem:[#allocation2 + $0x10] sm:$0xf]
    %v93 = vld [vmem:[#allocation2 + $0x14] sm:$0xf]
    %v94 = vld [vmem:[#allocation2 + $0x18] sm:$0xf]
    %v95 = vld [vmem:[#allocation2 + $0x1c] sm:$0xf]
    %v96 = vld [vmem:[#allocation2 + $0x20] sm:$0xf]
    %v97 = vld [vmem:[#allocation2 + $0x24] sm:$0xf]
    %v98 = vld [vmem:[#allocation2 + $0x28] sm:$0xf]
    %v99 = vld [vmem:[#allocation2 + $0x2c] sm:$0xf]
    %v100 = vld [vmem:[#allocation2 + $0x30] sm:$0xf]
    %v101 = vld [vmem:[#allocation2 + $0x34] sm:$0xf]
    %v102 = vld [vmem:[#allocation2 + $0x38] sm:$0xf]
    %v103 = vld [vmem:[#allocation2 + $0x3c] sm:$0xf]
    %v104 = vlaneseq
    %v105 = vshrl.u32 %v104, 7
    %v106 = vsub.s32 0, %v105
    %v107 = vrot.slane %v82, %v106
    %v124 = vunpack.c.l.b16 %v88
    %v125 = vunpack.c.l.b16 %v89
    %v126 = vunpack.c.l.b16 %v90
    %v127 = vunpack.c.l.b16 %v91
    %v128 = vunpack.c.l.b16 %v92
    %v129 = vunpack.c.l.b16 %v93
    %v130 = vunpack.c.l.b16 %v94
    %v131 = vunpack.c.l.b16 %v95
    %v132 = vunpack.c.l.b16 %v96
    %v133 = vunpack.c.l.b16 %v97
    %v134 = vunpack.c.l.b16 %v98
    %v135 = vunpack.c.l.b16 %v99
    %v136 = vunpack.c.l.b16 %v100
    %v137 = vunpack.c.l.b16 %v101
    %v138 = vunpack.c.l.b16 %v102
    %v139 = vunpack.c.l.b16 %v103
    %v140 = vpack.c.b16 %v125, %v124
    %v141 = vpack.c.b16 %v127, %v126
    %v142 = vpack.c.b16 %v129, %v128
    %v143 = vpack.c.b16 %v131, %v130
    %v144 = vpack.c.b16 %v133, %v132
    %v145 = vpack.c.b16 %v135, %v134
    %v146 = vpack.c.b16 %v137, %v136
    %v147 = vpack.c.b16 %v139, %v138
    %156 = vmatprep.subr.bf16.mxu0 0
    %157 = vmatpush1.bf16.msra.mxu0 %v147
    %158 = vmatprep.subr.bf16.mxu0 0
    %159 = vmatpush1.bf16.msra.mxu0 %v146
    %160 = vmatprep.subr.bf16.mxu0 0
    %161 = vmatpush1.bf16.msra.mxu0 %v145
    %162 = vmatprep.subr.bf16.mxu0 0
    %163 = vmatpush1.bf16.msra.mxu0 %v144
    %164 = vmatprep.subr.bf16.mxu0 0
    %165 = vmatpush1.bf16.msra.mxu0 %v143
    %166 = vmatprep.subr.bf16.mxu0 0
    %167 = vmatpush1.bf16.msra.mxu0 %v142
    %168 = vmatprep.subr.bf16.mxu0 0
    %169 = vmatpush1.bf16.msra.mxu0 %v141
    %170 = vmatprep.subr.bf16.mxu0 0
    %171 = vmatpush1.bf16.msra.mxu0 %v140
    %172 = vmatprep.subr.bf16.mxu0 0
    %173 = vmatpush2.bf16.msra.mxu0 0
    %174 = vmatprep.subr.bf16.mxu0 0
    %175 = vmatpush2.bf16.msra.mxu0 0
    %176 = vmatprep.subr.bf16.mxu0 0
    %177 = vmatpush2.bf16.msra.mxu0 0
    %178 = vmatprep.subr.bf16.mxu0 0
    %179 = vmatpush2.bf16.msra.mxu0 0
    %180 = vmatprep.subr.bf16.mxu0 0
    %181 = vmatpush2.bf16.msra.mxu0 0
    %182 = vmatprep.subr.bf16.mxu0 0
    %183 = vmatpush2.bf16.msra.mxu0 0
    %184 = vmatprep.subr.bf16.mxu0 0
    %185 = vmatpush2.bf16.msra.mxu0 0
    %186 = vmatprep.subr.bf16.mxu0 0
    %187 = vmatpush2.bf16.msra.mxu0 0
    %188 = vmatprep.mubr.bf16.mxu0 0
    %189 = vmatmul.mubr.bf16.gmra.mxu0 %v87
    %v190 = vpop.f32.mrf.mxu0
    %v191 = vadd.f32 %v107, %v190
    %v192 = vpop.f32.mrf.mxu0
    %v193 = vpop.f32.mrf.mxu0
    %v194 = vpop.f32.mrf.mxu0
    %195 = vdwg.mxu0
    %v196 = vtanh.pop %v191
    %197 = vadd.xlane.f32.xlu0 %v196
    %v198 = vpop.xlane.xlu0 %197
    %v199 = vmul.f32 %v196, %v196
    %200 = vadd.xlane.f32.xlu0 %v199
    %v201 = vpop.xlane.xlu0 %200
    %v202 = vmul.f32 %v198, 0.03125
    %v203 = vmul.f32 %v201, 0.03125
    %v204 = vmul.f32 %v202, %v202
    %v205 = vsub.f32 %v203, %v204
    %v206 = vsub.f32 %v196, %v202
    %v207 = vadd.f32 %v205, 1e-05
    %v208 = vrsqrt.pop %v207
    %v209 = vmul.f32 %v206, %v208
    %v210 = vlaneseq
    %v211 = vshrl.u32 %v210, 7
    %v212 = vsub.s32 0, %v211
    %v213 = vrot.slane %v83, %v212
    %v214 = vmul.f32 %v209, %v213
    %v215 = vlaneseq
    %v216 = vshrl.u32 %v215, 7
    %v217 = vsub.s32 0, %v216
    %v218 = vrot.slane %v84, %v217
    %v219 = vadd.f32 %v214, %v218
    %v220 = vpack.c.bf16 %v219, %v219
    %v221 = vld [vmem:[#allocation4] sm:$0xf]
    %v222 = vld [vmem:[#allocation4 + $0x4] sm:$0xf]
    %v223 = vld [vmem:[#allocation4 + $0x8] sm:$0xf]
    %v224 = vld [vmem:[#allocation4 + $0xc] sm:$0xf]
    %v225 = vld [vmem:[#allocation4 + $0x10] sm:$0xf]
    %v226 = vld [vmem:[#allocation4 + $0x14] sm:$0xf]
    %v227 = vld [vmem:[#allocation4 + $0x18] sm:$0xf]
    %v228 = vld [vmem:[#allocation4 + $0x1c] sm:$0xf]
    %v229 = vld [vmem:[#allocation4 + $0x20] sm:$0xf]
    %v230 = vld [vmem:[#allocation4 + $0x24] sm:$0xf]
    %v231 = vld [vmem:[#allocation4 + $0x28] sm:$0xf]
    %v232 = vld [vmem:[#allocation4 + $0x2c] sm:$0xf]
    %v233 = vld [vmem:[#allocation4 + $0x30] sm:$0xf]
    %v234 = vld [vmem:[#allocation4 + $0x34] sm:$0xf]
    %v235 = vld [vmem:[#allocation4 + $0x38] sm:$0xf]
    %v236 = vld [vmem:[#allocation4 + $0x3c] sm:$0xf]
    %v237 = vlaneseq
    %v238 = vshrl.u32 %v237, 7
    %v239 = vsub.s32 0, %v238
    %v240 = vrot.slane %v85, %v239
    %v257 = vunpack.c.l.b16 %v221
    %v258 = vunpack.c.l.b16 %v222
    %v259 = vunpack.c.l.b16 %v223
    %v260 = vunpack.c.l.b16 %v224
    %v261 = vunpack.c.l.b16 %v225
    %v262 = vunpack.c.l.b16 %v226
    %v263 = vunpack.c.l.b16 %v227
    %v264 = vunpack.c.l.b16 %v228
    %v265 = vunpack.c.l.b16 %v229
    %v266 = vunpack.c.l.b16 %v230
    %v267 = vunpack.c.l.b16 %v231
    %v268 = vunpack.c.l.b16 %v232
    %v269 = vunpack.c.l.b16 %v233
    %v270 = vunpack.c.l.b16 %v234
    %v271 = vunpack.c.l.b16 %v235
    %v272 = vunpack.c.l.b16 %v236
    %v273 = vpack.c.b16 %v258, %v257
    %v274 = vpack.c.b16 %v260, %v259
    %v275 = vpack.c.b16 %v262, %v261
    %v276 = vpack.c.b16 %v264, %v263
    %v277 = vpack.c.b16 %v266, %v265
    %v278 = vpack.c.b16 %v268, %v267
    %v279 = vpack.c.b16 %v270, %v269
    %v280 = vpack.c.b16 %v272, %v271
    %289 = vmatprep.subr.bf16.mxu0 0
    %290 = vmatpush1.bf16.msra.mxu0 %v280
    %291 = vmatprep.subr.bf16.mxu0 0
    %292 = vmatpush1.bf16.msra.mxu0 %v279
    %293 = vmatprep.subr.bf16.mxu0 0
    %294 = vmatpush1.bf16.msra.mxu0 %v278
    %295 = vmatprep.subr.bf16.mxu0 0
    %296 = vmatpush1.bf16.msra.mxu0 %v277
    %297 = vmatprep.subr.bf16.mxu0 0
    %298 = vmatpush1.bf16.msra.mxu0 %v276
    %299 = vmatprep.subr.bf16.mxu0 0
    %300 = vmatpush1.bf16.msra.mxu0 %v275
    %301 = vmatprep.subr.bf16.mxu0 0
    %302 = vmatpush1.bf16.msra.mxu0 %v274
    %303 = vmatprep.subr.bf16.mxu0 0
    %304 = vmatpush1.bf16.msra.mxu0 %v273
    %305 = vmatprep.subr.bf16.mxu0 0
    %306 = vmatpush2.bf16.msra.mxu0 0
    %307 = vmatprep.subr.bf16.mxu0 0
    %308 = vmatpush2.bf16.msra.mxu0 0
    %309 = vmatprep.subr.bf16.mxu0 0
    %310 = vmatpush2.bf16.msra.mxu0 0
    %311 = vmatprep.subr.bf16.mxu0 0
    %312 = vmatpush2.bf16.msra.mxu0 0
    %313 = vmatprep.subr.bf16.mxu0 0
    %314 = vmatpush2.bf16.msra.mxu0 0
    %315 = vmatprep.subr.bf16.mxu0 0
    %316 = vmatpush2.bf16.msra.mxu0 0
    %317 = vmatprep.subr.bf16.mxu0 0
    %318 = vmatpush2.bf16.msra.mxu0 0
    %319 = vmatprep.subr.bf16.mxu0 0
    %320 = vmatpush2.bf16.msra.mxu0 0
    %321 = vmatprep.mubr.bf16.mxu0 0
    %322 = vmatmul.mubr.bf16.gmra.mxu0 %v220
    %v323 = vpop.f32.mrf.mxu0
    %v324 = vadd.f32 %v240, %v323
    %v325 = vpop.f32.mrf.mxu0
    %v326 = vpop.f32.mrf.mxu0
    %v327 = vpop.f32.mrf.mxu0
    %328 = vdwg.mxu0
    %v329 = vmul.f32 %v324, 0.5
    %v330 = vmul.f32 %v324, 0.70710677
    %v331 = verf.f32.pop %v330
    %v332 = vadd.f32 %v331, 1.0
    %v333 = vmul.f32 %v329, %v332
    %v334 = vadd.f32 %v333, %v219
    %v335 = vpack.c.bf16 %v334, %v334
    %v336 = vld [vmem:[#allocation6] sm:$0xf]
    %v337 = vld [vmem:[#allocation6 + $0x4] sm:$0xf]
    %v338 = vld [vmem:[#allocation6 + $0x8] sm:$0xf]
    %v339 = vld [vmem:[#allocation6 + $0xc] sm:$0xf]
    %v340 = vld [vmem:[#allocation6 + $0x10] sm:$0xf]
    %v341 = vld [vmem:[#allocation6 + $0x14] sm:$0xf]
    %v342 = vld [vmem:[#allocation6 + $0x18] sm:$0xf]
    %v343 = vld [vmem:[#allocation6 + $0x1c] sm:$0xf]
    %v344 = vld [vmem:[#allocation6 + $0x20] sm:$0xf]
    %v345 = vld [vmem:[#allocation6 + $0x24] sm:$0xf]
    %v346 = vld [vmem:[#allocation6 + $0x28] sm:$0xf]
    %v347 = vld [vmem:[#allocation6 + $0x2c] sm:$0xf]
    %v348 = vld [vmem:[#allocation6 + $0x30] sm:$0xf]
    %v349 = vld [vmem:[#allocation6 + $0x34] sm:$0xf]
    %v350 = vld [vmem:[#allocation6 + $0x38] sm:$0xf]
    %v351 = vld [vmem:[#allocation6 + $0x3c] sm:$0xf]
    %v352 = vlaneseq
    %v353 = vshrl.u32 %v352, 7
    %v354 = vsub.s32 0, %v353
    %v355 = vrot.slane %v86, %v354
    %v372 = vunpack.c.l.b16 %v336
    %v373 = vunpack.c.l.b16 %v337
    %v374 = vunpack.c.l.b16 %v338
    %v375 = vunpack.c.l.b16 %v339
    %v376 = vunpack.c.l.b16 %v340
    %v377 = vunpack.c.l.b16 %v341
    %v378 = vunpack.c.l.b16 %v342
    %v379 = vunpack.c.l.b16 %v343
    %v380 = vunpack.c.l.b16 %v344
    %v381 = vunpack.c.l.b16 %v345
    %v382 = vunpack.c.l.b16 %v346
    %v383 = vunpack.c.l.b16 %v347
    %v384 = vunpack.c.l.b16 %v348
    %v385 = vunpack.c.l.b16 %v349
    %v386 = vunpack.c.l.b16 %v350
    %v387 = vunpack.c.l.b16 %v351
    %v388 = vpack.c.b16 %v373, %v372
    %v389 = vpack.c.b16 %v375, %v374
    %v390 = vpack.c.b16 %v377, %v376
    %v391 = vpack.c.b16 %v379, %v378
    %v392 = vpack.c.b16 %v381, %v380
    %v393 = vpack.c.b16 %v383, %v382
    %v394 = vpack.c.b16 %v385, %v384
    %v395 = vpack.c.b16 %v387, %v386
    %404 = vmatprep.subr.bf16.mxu0 0
    %405 = vmatpush1.bf16.msra.mxu0 %v395
    %406 = vmatprep.subr.bf16.mxu0 0
    %407 = vmatpush1.bf16.msra.mxu0 %v394
    %408 = vmatprep.subr.bf16.mxu0 0
    %409 = vmatpush1.bf16.msra.mxu0 %v393
    %410 = vmatprep.subr.bf16.mxu0 0
    %411 = vmatpush1.bf16.msra.mxu0 %v392
    %412 = vmatprep.subr.bf16.mxu0 0
    %413 = vmatpush1.bf16.msra.mxu0 %v391
    %414 = vmatprep.subr.bf16.mxu0 0
    %415 = vmatpush1.bf16.msra.mxu0 %v390
    %416 = vmatprep.subr.bf16.mxu0 0
    %417 = vmatpush1.bf16.msra.mxu0 %v389
    %418 = vmatprep.subr.bf16.mxu0 0
    %419 = vmatpush1.bf16.msra.mxu0 %v388
    %420 = vmatprep.subr.bf16.mxu0 0
    %421 = vmatpush2.bf16.msra.mxu0 0
    %422 = vmatprep.subr.bf16.mxu0 0
    %423 = vmatpush2.bf16.msra.mxu0 0
    %424 = vmatprep.subr.bf16.mxu0 0
    %425 = vmatpush2.bf16.msra.mxu0 0
    %426 = vmatprep.subr.bf16.mxu0 0
    %427 = vmatpush2.bf16.msra.mxu0 0
    %428 = vmatprep.subr.bf16.mxu0 0
    %429 = vmatpush2.bf16.msra.mxu0 0
    %430 = vmatprep.subr.bf16.mxu0 0
    %431 = vmatpush2.bf16.msra.mxu0 0
    %432 = vmatprep.subr.bf16.mxu0 0
    %433 = vmatpush2.bf16.msra.mxu0 0
    %434 = vmatprep.subr.bf16.mxu0 0
    %435 = vmatpush2.bf16.msra.mxu0 0
    %436 = vmatprep.mubr.bf16.mxu0 0
    %437 = vmatmul.mubr.bf16.gmra.mxu0 %v335
    %v438 = vpop.f32.mrf.mxu0
    %v439 = vadd.f32 %v355, %v438
    %v440 = vpop.f32.mrf.mxu0
    %v441 = vpop.f32.mrf.mxu0
    %v442 = vpop.f32.mrf.mxu0
    %443 = vdwg.mxu0
    %v444 = vmul.f32 %v439, 0.5
    %v445 = vmul.f32 %v439, 0.70710677
    %v446 = verf.f32.pop %v445
    %v447 = vadd.f32 %v446, 1.0
    %v448 = vmul.f32 %v444, %v447
    %v449 = vadd.f32 %v448, %v334
    %v450 = vpack.c.bf16 %v449, %v449
    %v451 = vld [vmem:[#allocation7] sm:$0xf]
    %v452 = vld [vmem:[#allocation7 + $0x4] sm:$0xf]
    %v453 = vld [vmem:[#allocation7 + $0x8] sm:$0xf]
    %v454 = vld [vmem:[#allocation7 + $0xc] sm:$0xf]
    %v455 = vld [vmem:[#allocation7 + $0x10] sm:$0xf]
    %v456 = vld [vmem:[#allocation7 + $0x14] sm:$0xf]
    %v457 = vld [vmem:[#allocation7 + $0x18] sm:$0xf]
    %v458 = vld [vmem:[#allocation7 + $0x1c] sm:$0xf]
    %v459 = vld [vmem:[#allocation7 + $0x20] sm:$0xf]
    %v460 = vld [vmem:[#allocation7 + $0x24] sm:$0xf]
    %v461 = vld [vmem:[#allocation7 + $0x28] sm:$0xf]
    %v462 = vld [vmem:[#allocation7 + $0x2c] sm:$0xf]
    %v463 = vld [vmem:[#allocation7 + $0x30] sm:$0xf]
    %v464 = vld [vmem:[#allocation7 + $0x34] sm:$0xf]
    %v465 = vld [vmem:[#allocation7 + $0x38] sm:$0xf]
    %v466 = vld [vmem:[#allocation7 + $0x3c] sm:$0xf]
    %v467 = vld [vmem:[%s6] sm:$0x1]
    %v469 = vlaneseq
    %v470 = vshrl.u32 %v469, 7
    %v471 = vsub.s32 0, %v470
    %v472 = vrot.slane %v467, %v471
    %v490 = vunpack.c.l.b16 %v451
    %v491 = vunpack.c.l.b16 %v452
    %v492 = vunpack.c.l.b16 %v453
    %v493 = vunpack.c.l.b16 %v454
    %v494 = vunpack.c.l.b16 %v455
    %v495 = vunpack.c.l.b16 %v456
    %v496 = vunpack.c.l.b16 %v457
    %v497 = vunpack.c.l.b16 %v458
    %v498 = vunpack.c.l.b16 %v459
    %v499 = vunpack.c.l.b16 %v460
    %v500 = vunpack.c.l.b16 %v461
    %v501 = vunpack.c.l.b16 %v462
    %v502 = vunpack.c.l.b16 %v463
    %v503 = vunpack.c.l.b16 %v464
    %v504 = vunpack.c.l.b16 %v465
    %v505 = vunpack.c.l.b16 %v466
    %v506 = vpack.c.b16 %v491, %v490
    %v507 = vpack.c.b16 %v493, %v492
    %v508 = vpack.c.b16 %v495, %v494
    %v509 = vpack.c.b16 %v497, %v496
    %v510 = vpack.c.b16 %v499, %v498
    %v511 = vpack.c.b16 %v501, %v500
    %v512 = vpack.c.b16 %v503, %v502
    %v513 = vpack.c.b16 %v505, %v504
    %522 = vmatprep.subr.bf16.mxu0 0
    %523 = vmatpush1.bf16.msra.mxu0 %v513
    %524 = vmatprep.subr.bf16.mxu0 0
    %525 = vmatpush1.bf16.msra.mxu0 %v512
    %526 = vmatprep.subr.bf16.mxu0 0
    %527 = vmatpush1.bf16.msra.mxu0 %v511
    %528 = vmatprep.subr.bf16.mxu0 0
    %529 = vmatpush1.bf16.msra.mxu0 %v510
    %530 = vmatprep.subr.bf16.mxu0 0
    %531 = vmatpush1.bf16.msra.mxu0 %v509
    %532 = vmatprep.subr.bf16.mxu0 0
    %533 = vmatpush1.bf16.msra.mxu0 %v508
    %534 = vmatprep.subr.bf16.mxu0 0
    %535 = vmatpush1.bf16.msra.mxu0 %v507
    %536 = vmatprep.subr.bf16.mxu0 0
    %537 = vmatpush1.bf16.msra.mxu0 %v506
    %538 = vmatprep.subr.bf16.mxu0 0
    %539 = vmatpush2.bf16.msra.mxu0 0
    %540 = vmatprep.subr.bf16.mxu0 0
    %541 = vmatpush2.bf16.msra.mxu0 0
    %542 = vmatprep.subr.bf16.mxu0 0
    %543 = vmatpush2.bf16.msra.mxu0 0
    %544 = vmatprep.subr.bf16.mxu0 0
    %545 = vmatpush2.bf16.msra.mxu0 0
    %546 = vmatprep.subr.bf16.mxu0 0
    %547 = vmatpush2.bf16.msra.mxu0 0
    %548 = vmatprep.subr.bf16.mxu0 0
    %549 = vmatpush2.bf16.msra.mxu0 0
    %550 = vmatprep.subr.bf16.mxu0 0
    %551 = vmatpush2.bf16.msra.mxu0 0
    %552 = vmatprep.subr.bf16.mxu0 0
    %553 = vmatpush2.bf16.msra.mxu0 0
    %554 = vmatprep.mubr.bf16.mxu0 0
    %555 = vmatmul.mubr.bf16.gmra.mxu0 %v450
    %v556 = vpop.f32.mrf.mxu0
    %v557 = vadd.f32 %v472, %v556
    %v558 = vpop.f32.mrf.mxu0
    %v559 = vpop.f32.mrf.mxu0
    %v560 = vpop.f32.mrf.mxu0
    %561 = vdwg.mxu0
    %562 = vst [vmem:[%s7] sm:$0xff] %v557
    // Predicated region
    $region46: #{_head_call.1} parent=1 // pred_check
      _
    $region47: #{_head_call.1} parent=1 // pred_check_branch
      %564 = sbr.rel (0) target = $region49
    $region48: #{_head_call.1} parent=1 // pred_region
      _
    $region49: #{_head_call.1} parent=1 // pred_fallthru
      _
    // Predicated region
    $region50: #{_head_call.1} parent=1 // pred_check
      _
    $region51: #{_head_call.1} parent=1 // pred_check_branch
      %566 = sbr.rel (0) target = $region53
    $region52: #{_head_call.1} parent=1 // pred_region
      _
    $region53: #{_head_call.1} parent=1 // pred_fallthru
      _
    %567 = vsyncpa [#allocation3], 1
    %568 = vsyncpa [#allocation5], 1
    %569 = vsyncpa [#allocation8], 1

</llo_original>
